<compile_context>
chip_gen: v7x
topology: tpu7x:2x2x1
jax: 0.10.0
libtpu: 0.0.40
codegen_flags: <defaults>
</compile_context>

<pallas_src>
import functools

import jax
import jax.numpy as jnp
from jax.experimental import pallas as pl
from jax.experimental.pallas import tpu as pltpu


FINAL_NR_FILT = 1280   # EfficientNet head width (matches `final_nr_filt`)
STEM_CH = 32
KSIZE = 3
STRIDE = 2
PAD = 1
C_CHUNK = 256          # head channels processed per chunk (1280 = 5 * 256)


# ----------------------------------------------------------------------------
# In-kernel helpers
# ----------------------------------------------------------------------------
def _silu(y):
    """y * sigmoid(y); sigmoid via one EUP tanh: sig(y) = 0.5*(tanh(y/2)+1)."""
    return y * (0.5 * jnp.tanh(0.5 * y) + 0.5)


# ----------------------------------------------------------------------------
# Fused backbone kernel: stem conv + head conv + SiLU + streamed avg-pool
# ----------------------------------------------------------------------------
def _hydra_backbone_kernel(taps_ref, sw_ref, sb_ref, hw_ref, hb_ref,
                           o_ref, acc_ref, *, inv_s):
    """One (branch, image, spatial-tile) grid step.

    taps_ref : (M, 9)      f32   im2col'd stem taps for this spatial tile
    sw_ref   : (9, 32)     f32   stem conv weight (this branch)
    sb_ref   : (1, 32)     f32   stem conv bias
    hw_ref   : (32, 1280)  bf16  1x1 head conv weight
    hb_ref   : (1, 1280)   f32   head conv bias
    o_ref    : (B, 1280)   f32   pooled features for this branch (resident)
    acc_ref  : (1, 1280)   f32   running spatial sum for the current image
    """
    img = pl.program_id(1)
    m = pl.program_id(2)

    @pl.when(m == 0)
    def _init():
        acc_ref[...] = jnp.zeros_like(acc_ref)

    # ---- stem 3x3/stride-2 conv (Cin=1) as one MXU matmul + SiLU (f32) -----
    stem = jnp.dot(taps_ref[...], sw_ref[...],
                   preferred_element_type=jnp.float32)          # (M, 32)
    stem = _silu(stem + sb_ref[...])
    stem_bf = stem.astype(jnp.bfloat16)

    # ---- head 1x1 conv + SiLU + partial average pool, 256 lanes at a time --
    # Static chunk loop keeps live vregs bounded (no (M, 1280) f32 slab) and
    # the pool is a cheap sublane reduce (XLU), not a masked MXU matmul.
    for c0 in range(0, FINAL_NR_FILT, C_CHUNK):
        h = jnp.dot(stem_bf, hw_ref[:, c0:c0 + C_CHUNK],
                    preferred_element_type=jnp.float32)          # (M, 256)
        h = _silu(h + hb_ref[:, c0:c0 + C_CHUNK])
        acc_ref[:, c0:c0 + C_CHUNK] += h.sum(axis=0, keepdims=True)

    # ---- finalize: mean over spatial positions, scaled by 1/S in f32 -------
    @pl.when(m == pl.num_programs(2) - 1)
    def _finalize():
        o_ref[pl.ds(img, 1), :] = acc_ref[...] * inv_s


# ----------------------------------------------------------------------------
# Wrapper glue
# ----------------------------------------------------------------------------
def _pick_m_tile(s):
    """Largest spatial tile (divisor of s, multiple of 8) near 256 rows."""
    for cand in (256, 512, 128, 64, 32, 16, 8):
        if cand <= s and s % cand == 0:
            return cand
    return s   # block == full dim is always legal


def extract_taps(x):
    """NCHW (B, 2, H, W) -> (2, B, Ho*Wo, 9) f32 tap slabs + spatial count."""
    # TODO(synk): for large H, W move the 9-tap im2col into the kernel (DMA the
    # padded per-branch block, shifted strided reads) to avoid this 9x HBM copy.
    b, c, h, w = x.shape
    xp = jnp.pad(x, ((0, 0), (0, 0), (PAD, PAD), (PAD, PAD)))
    ho = (h + 2 * PAD - KSIZE) // STRIDE + 1
    wo = (w + 2 * PAD - KSIZE) // STRIDE + 1
    taps = []
    for dy in range(KSIZE):
        for dx in range(KSIZE):
            taps.append(
                xp[:, :, dy:dy + STRIDE * ho:STRIDE, dx:dx + STRIDE * wo:STRIDE])
    t = jnp.stack(taps, axis=-1)                       # (B, 2, Ho, Wo, 9)
    t = jnp.transpose(t, (1, 0, 2, 3, 4))              # (2, B, Ho, Wo, 9)
    return (t.reshape(c, b, ho * wo, KSIZE * KSIZE).astype(jnp.float32),
            ho * wo)


# ----------------------------------------------------------------------------
# Model forward: one fused pallas_call over both branches + tiny wrapper fc
# ----------------------------------------------------------------------------
def enet_hydra_forward(x, params):
    """x: (B, 2, H, W) in PyTorch NCHW convention. Returns (B, out_channels)."""
    b = x.shape[0]
    taps, s = extract_taps(x)                          # (2, B, S, 9)
    nbr = taps.shape[0]
    m_tile = _pick_m_tile(s)
    assert s % m_tile == 0
    n_m = s // m_tile

    kernel = functools.partial(_hydra_backbone_kernel, inv_s=1.0 / s)

    flops = 2 * nbr * b * s * (KSIZE * KSIZE * STEM_CH
                               + STEM_CH * FINAL_NR_FILT)
    transcendentals = nbr * b * s * (STEM_CH + FINAL_NR_FILT)
    bytes_accessed = (taps.size * 4
                      + params["stem_w"].size * 4 + params["stem_b"].size * 4
                      + params["head_w"].size * 2 + params["head_b"].size * 4
                      + nbr * b * FINAL_NR_FILT * 4)

    grid_spec = pltpu.PrefetchScalarGridSpec(
        num_scalar_prefetch=0,
        grid=(nbr, b, n_m),
        in_specs=[
            pl.BlockSpec((None, None, m_tile, KSIZE * KSIZE),
                         lambda br, i, m: (br, i, m, 0)),                  # taps
            pl.BlockSpec((None, KSIZE * KSIZE, STEM_CH),
                         lambda br, i, m: (br, 0, 0)),                     # stem_w
            pl.BlockSpec((None, 1, STEM_CH),
                         lambda br, i, m: (br, 0, 0)),                     # stem_b
            pl.BlockSpec((None, STEM_CH, FINAL_NR_FILT),
                         lambda br, i, m: (br, 0, 0)),                     # head_w
            pl.BlockSpec((None, 1, FINAL_NR_FILT),
                         lambda br, i, m: (br, 0, 0)),                     # head_b
        ],
        out_specs=pl.BlockSpec((None, b, FINAL_NR_FILT),
                               lambda br, i, m: (br, 0, 0)),
        scratch_shapes=[pltpu.VMEM((1, FINAL_NR_FILT), jnp.float32)],
    )

    pooled = pl.pallas_call(
        kernel,
        out_shape=jax.ShapeDtypeStruct((nbr, b, FINAL_NR_FILT), jnp.float32),
        grid_spec=grid_spec,
        compiler_params=pltpu.CompilerParams(
            # Branch axis parallel -> v7x can run one branch per TensorCore;
            # image / spatial-tile axes carry the resident accumulators.
            dimension_semantics=("parallel", "arbitrary", "arbitrary"),
            # Per-step working set is only a few MiB; 48 MiB keeps headroom
            # within v7x's 64 MiB physical VMEM (v5e/v6e have 128 MiB).
            vmem_limit_bytes=48 * 1024 * 1024,
        ),
        cost_estimate=pl.CostEstimate(flops=flops,
                                      transcendentals=transcendentals,
                                      bytes_accessed=bytes_accessed),
    )(taps, params["stem_w"], params["stem_b"],
      params["head_w"], params["head_b"])

    # Hydra head: concat the two branches' pooled features + tiny fc (XLA),
    # keeping the kernel output lane-dense (1280) instead of out_ch=6 lanes.
    feats = jnp.concatenate([pooled[0], pooled[1]], axis=-1)   # (B, 2560)
    return feats @ params["fc_w"] + params["fc_b"]


# ----------------------------------------------------------------------------
# Deterministic parameter init (branch-stacked layout)
# ----------------------------------------------------------------------------
def init_params(key, out_channels):
    k1, k2, k3 = jax.random.split(key, 3)
    return {
        # stem path stays f32 (precision of the first conv)
        "stem_w": jax.random.normal(
            k1, (2, KSIZE * KSIZE, STEM_CH), jnp.float32) * 0.2,
        "stem_b": jnp.zeros((2, 1, STEM_CH), jnp.float32),
        # MXU operand in bf16 (f32 accumulate inside the kernel)
        "head_w": (jax.random.normal(
            k2, (2, STEM_CH, FINAL_NR_FILT), jnp.float32) * 0.1
        ).astype(jnp.bfloat16),
        "head_b": jnp.zeros((2, 1, FINAL_NR_FILT), jnp.float32),
        # hydra fc on concat([pooled_1, pooled_2]) — runs in the wrapper (f32)
        "fc_w": jax.random.normal(
            k3, (2 * FINAL_NR_FILT, out_channels), jnp.float32) * 0.02,
        "fc_b": jnp.zeros((out_channels,), jnp.float32),
    }


# ----------------------------------------------------------------------------
# Pure-JAX reference (same synthetic backbone skeleton, f32 math)
# ----------------------------------------------------------------------------
def reference_forward(x, params):
    taps, _ = extract_taps(x)                           # (2, B, S, 9)
    pooled = []
    for br in range(2):
        stem = jax.nn.silu(taps[br] @ params["stem_w"][br]
                           + params["stem_b"][br])      # (B, S, 32)
        h = jax.nn.silu(stem @ params["head_w"][br].astype(jnp.float32)
                        + params["head_b"][br])         # (B, S, 1280)
        pooled.append(h.mean(axis=1))                   # (B, 1280)
    feats = jnp.concatenate(pooled, axis=-1)
    return feats @ params["fc_w"] + params["fc_b"]


if __name__ == "__main__":
    key = jax.random.PRNGKey(0)
    B, C, H, W = 2, 2, 16, 16
    out_channels = 6

    params = init_params(key, out_channels)
    x = jax.random.normal(jax.random.fold_in(key, 123), (B, C, H, W),
                          jnp.float32)

    fwd = jax.jit(functools.partial(enet_hydra_forward, params=params))
    y = fwd(x)
    jax.block_until_ready(y)

    assert y.shape == (B, out_channels), y.shape
    assert bool(jnp.all(jnp.isfinite(y)))

    y_ref = reference_forward(x, params)
    assert bool(jnp.allclose(y, y_ref, rtol=5e-2, atol=2e-2)), (
        float(jnp.max(jnp.abs(y - y_ref))))

    print("KERNEL_OK")
</pallas_src>

<mosaic_0001>
module attributes {stable_mosaic.version = 11 : i64} {
  func.func @_hydra_backbone_kernel(%arg0: i32, %arg1: i32, %arg2: i32, %arg3: memref<1x1x64x9xf32, #tpu.memory_space<vmem>>, %arg4: memref<1x9x32xf32, #tpu.memory_space<vmem>>, %arg5: memref<1x1x32xf32, #tpu.memory_space<vmem>>, %arg6: memref<1x32x1280xbf16, #tpu.memory_space<vmem>>, %arg7: memref<1x1x1280xf32, #tpu.memory_space<vmem>>, %arg8: memref<1x2x1280xf32, #tpu.memory_space<vmem>>, %arg9: memref<1x1280xf32, #tpu.memory_space<vmem>>) attributes {dimension_semantics = [#tpu.dimension_semantics<parallel>, #tpu.dimension_semantics<arbitrary>, #tpu.dimension_semantics<arbitrary>], iteration_bounds = array<i64: 2, 2, 1>, scalar_prefetch = 0 : i64, scratch_operands = 1 : i64, tpu.core_type = #tpu.core_type<tc>, window_params = [{transform_indices = @transform_0, window_bounds = array<i64: 1, 1, 64, 9>}, {transform_indices = @transform_1, window_bounds = array<i64: 1, 9, 32>}, {transform_indices = @transform_2, window_bounds = array<i64: 1, 1, 32>}, {transform_indices = @transform_3, window_bounds = array<i64: 1, 32, 1280>}, {transform_indices = @transform_4, window_bounds = array<i64: 1, 1, 1280>}, {transform_indices = @transform_5, window_bounds = array<i64: 1, 2, 1280>}]} {
    %c0_i32 = arith.constant 0 : i32
    %0 = arith.cmpi eq, %arg2, %c0_i32 : i32
    %1 = arith.extui %0 : i1 to i32
    %c0_i32_0 = arith.constant 0 : i32
    %2 = arith.cmpi ne, %1, %c0_i32_0 : i32
    scf.if %2 {
      %cst_86 = arith.constant 0.000000e+00 : f32
      %124 = vector.broadcast %cst_86 : f32 to vector<1x1280xf32>
      %c0_87 = arith.constant 0 : index
      %c0_88 = arith.constant 0 : index
      %125 = vector.load %arg9[%c0_87, %c0_88] : memref<1x1280xf32, #tpu.memory_space<vmem>>, vector<1x1280xf32>
      tpu.vector_store %arg9[%c0_87, %c0_88], %124 {strides = array<i32>} : memref<1x1280xf32, #tpu.memory_space<vmem>>, vector<1x1280xf32>,
    } else {
    }
    %c0 = arith.constant 0 : index
    %c0_1 = arith.constant 0 : index
    %c0_2 = arith.constant 0 : index
    %c0_3 = arith.constant 0 : index
    %3 = vector.load %arg3[%c0, %c0_1, %c0_2, %c0_3] : memref<1x1x64x9xf32, #tpu.memory_space<vmem>>, vector<1x1x64x9xf32>
    %4 = vector.shape_cast %3 : vector<1x1x64x9xf32> to vector<64x9xf32>
    %c0_4 = arith.constant 0 : index
    %c0_5 = arith.constant 0 : index
    %c0_6 = arith.constant 0 : index
    %5 = vector.load %arg4[%c0_4, %c0_5, %c0_6] : memref<1x9x32xf32, #tpu.memory_space<vmem>>, vector<1x9x32xf32>
    %6 = vector.shape_cast %5 : vector<1x9x32xf32> to vector<9x32xf32>
    %cst = arith.constant dense<0.000000e+00> : vector<64x32xf32>
    %7 = tpu.matmul %4, %6, %cst {dimension_numbers = #tpu.dot_dimension_numbers<[1], [0], [0], [1], [0, 0, 1, 1], [], []>} : vector<64x9xf32>, vector<9x32xf32>, vector<64x32xf32> -> vector<64x32xf32>
    %c0_7 = arith.constant 0 : index
    %c0_8 = arith.constant 0 : index
    %c0_9 = arith.constant 0 : index
    %8 = vector.load %arg5[%c0_7, %c0_8, %c0_9] : memref<1x1x32xf32, #tpu.memory_space<vmem>>, vector<1x1x32xf32>
    %9 = vector.shape_cast %8 : vector<1x1x32xf32> to vector<1x32xf32>
    %10 = vector.broadcast %9 : vector<1x32xf32> to vector<64x32xf32>
    %11 = arith.addf %7, %10 : vector<64x32xf32>
    %cst_10 = arith.constant 5.000000e-01 : f32
    %12 = vector.broadcast %cst_10 : f32 to vector<64x32xf32>
    %13 = arith.mulf %12, %11 : vector<64x32xf32>
    %14 = math.tanh %13 : vector<64x32xf32>
    %cst_11 = arith.constant 5.000000e-01 : f32
    %15 = vector.broadcast %cst_11 : f32 to vector<64x32xf32>
    %16 = arith.mulf %15, %14 : vector<64x32xf32>
    %cst_12 = arith.constant 5.000000e-01 : f32
    %17 = vector.broadcast %cst_12 : f32 to vector<64x32xf32>
    %18 = arith.addf %16, %17 : vector<64x32xf32>
    %19 = arith.mulf %11, %18 : vector<64x32xf32>
    %20 = arith.truncf %19 : vector<64x32xf32> to vector<64x32xbf16>
    %c0_13 = arith.constant 0 : index
    %c0_14 = arith.constant 0 : index
    %c0_15 = arith.constant 0 : index
    %21 = vector.load %arg6[%c0_13, %c0_14, %c0_15] : memref<1x32x1280xbf16, #tpu.memory_space<vmem>>, vector<1x32x256xbf16>
    %22 = vector.shape_cast %21 : vector<1x32x256xbf16> to vector<32x256xbf16>
    %cst_16 = arith.constant dense<0.000000e+00> : vector<64x256xf32>
    %23 = tpu.matmul %20, %22, %cst_16 {dimension_numbers = #tpu.dot_dimension_numbers<[1], [0], [0], [1], [0, 0, 1, 1], [], []>} : vector<64x32xbf16>, vector<32x256xbf16>, vector<64x256xf32> -> vector<64x256xf32>
    %c0_17 = arith.constant 0 : index
    %c0_18 = arith.constant 0 : index
    %c0_19 = arith.constant 0 : index
    %24 = vector.load %arg7[%c0_17, %c0_18, %c0_19] : memref<1x1x1280xf32, #tpu.memory_space<vmem>>, vector<1x1x256xf32>
    %25 = vector.shape_cast %24 : vector<1x1x256xf32> to vector<1x256xf32>
    %26 = vector.broadcast %25 : vector<1x256xf32> to vector<64x256xf32>
    %27 = arith.addf %23, %26 : vector<64x256xf32>
    %cst_20 = arith.constant 5.000000e-01 : f32
    %28 = vector.broadcast %cst_20 : f32 to vector<64x256xf32>
    %29 = arith.mulf %28, %27 : vector<64x256xf32>
    %30 = math.tanh %29 : vector<64x256xf32>
    %cst_21 = arith.constant 5.000000e-01 : f32
    %31 = vector.broadcast %cst_21 : f32 to vector<64x256xf32>
    %32 = arith.mulf %31, %30 : vector<64x256xf32>
    %cst_22 = arith.constant 5.000000e-01 : f32
    %33 = vector.broadcast %cst_22 : f32 to vector<64x256xf32>
    %34 = arith.addf %32, %33 : vector<64x256xf32>
    %35 = arith.mulf %27, %34 : vector<64x256xf32>
    %c0_23 = arith.constant 0 : index
    %c0_24 = arith.constant 0 : index
    %36 = vector.load %arg9[%c0_23, %c0_24] : memref<1x1280xf32, #tpu.memory_space<vmem>>, vector<1x256xf32>
    %cst_25 = arith.constant dense<0.000000e+00> : vector<256xf32>
    %37 = vector.multi_reduction <add>, %35, %cst_25 [0] : vector<64x256xf32> to vector<256xf32>
    %38 = vector.shape_cast %37 : vector<256xf32> to vector<1x256xf32>
    %39 = arith.addf %36, %38 : vector<1x256xf32>
    %c0_26 = arith.constant 0 : index
    %c0_27 = arith.constant 0 : index
    %40 = vector.load %arg9[%c0_26, %c0_27] : memref<1x1280xf32, #tpu.memory_space<vmem>>, vector<1x256xf32>
    tpu.vector_store %arg9[%c0_26, %c0_27], %39 {strides = array<i32>} : memref<1x1280xf32, #tpu.memory_space<vmem>>, vector<1x256xf32>,
    %c0_28 = arith.constant 0 : index
    %c0_29 = arith.constant 0 : index
    %c256 = arith.constant 256 : index
    %41 = vector.load %arg6[%c0_28, %c0_29, %c256] : memref<1x32x1280xbf16, #tpu.memory_space<vmem>>, vector<1x32x256xbf16>
    %42 = vector.shape_cast %41 : vector<1x32x256xbf16> to vector<32x256xbf16>
    %cst_30 = arith.constant dense<0.000000e+00> : vector<64x256xf32>
    %43 = tpu.matmul %20, %42, %cst_30 {dimension_numbers = #tpu.dot_dimension_numbers<[1], [0], [0], [1], [0, 0, 1, 1], [], []>} : vector<64x32xbf16>, vector<32x256xbf16>, vector<64x256xf32> -> vector<64x256xf32>
    %c0_31 = arith.constant 0 : index
    %c0_32 = arith.constant 0 : index
    %c256_33 = arith.constant 256 : index
    %44 = vector.load %arg7[%c0_31, %c0_32, %c256_33] : memref<1x1x1280xf32, #tpu.memory_space<vmem>>, vector<1x1x256xf32>
    %45 = vector.shape_cast %44 : vector<1x1x256xf32> to vector<1x256xf32>
    %46 = vector.broadcast %45 : vector<1x256xf32> to vector<64x256xf32>
    %47 = arith.addf %43, %46 : vector<64x256xf32>
    %cst_34 = arith.constant 5.000000e-01 : f32
    %48 = vector.broadcast %cst_34 : f32 to vector<64x256xf32>
    %49 = arith.mulf %48, %47 : vector<64x256xf32>
    %50 = math.tanh %49 : vector<64x256xf32>
    %cst_35 = arith.constant 5.000000e-01 : f32
    %51 = vector.broadcast %cst_35 : f32 to vector<64x256xf32>
    %52 = arith.mulf %51, %50 : vector<64x256xf32>
    %cst_36 = arith.constant 5.000000e-01 : f32
    %53 = vector.broadcast %cst_36 : f32 to vector<64x256xf32>
    %54 = arith.addf %52, %53 : vector<64x256xf32>
    %55 = arith.mulf %47, %54 : vector<64x256xf32>
    %c0_37 = arith.constant 0 : index
    %c256_38 = arith.constant 256 : index
    %56 = vector.load %arg9[%c0_37, %c256_38] : memref<1x1280xf32, #tpu.memory_space<vmem>>, vector<1x256xf32>
    %cst_39 = arith.constant dense<0.000000e+00> : vector<256xf32>
    %57 = vector.multi_reduction <add>, %55, %cst_39 [0] : vector<64x256xf32> to vector<256xf32>
    %58 = vector.shape_cast %57 : vector<256xf32> to vector<1x256xf32>
    %59 = arith.addf %56, %58 : vector<1x256xf32>
    %c0_40 = arith.constant 0 : index
    %c256_41 = arith.constant 256 : index
    %60 = vector.load %arg9[%c0_40, %c256_41] : memref<1x1280xf32, #tpu.memory_space<vmem>>, vector<1x256xf32>
    tpu.vector_store %arg9[%c0_40, %c256_41], %59 {strides = array<i32>} : memref<1x1280xf32, #tpu.memory_space<vmem>>, vector<1x256xf32>,
    %c0_42 = arith.constant 0 : index
    %c0_43 = arith.constant 0 : index
    %c512 = arith.constant 512 : index
    %61 = vector.load %arg6[%c0_42, %c0_43, %c512] : memref<1x32x1280xbf16, #tpu.memory_space<vmem>>, vector<1x32x256xbf16>
    %62 = vector.shape_cast %61 : vector<1x32x256xbf16> to vector<32x256xbf16>
    %cst_44 = arith.constant dense<0.000000e+00> : vector<64x256xf32>
    %63 = tpu.matmul %20, %62, %cst_44 {dimension_numbers = #tpu.dot_dimension_numbers<[1], [0], [0], [1], [0, 0, 1, 1], [], []>} : vector<64x32xbf16>, vector<32x256xbf16>, vector<64x256xf32> -> vector<64x256xf32>
    %c0_45 = arith.constant 0 : index
    %c0_46 = arith.constant 0 : index
    %c512_47 = arith.constant 512 : index
    %64 = vector.load %arg7[%c0_45, %c0_46, %c512_47] : memref<1x1x1280xf32, #tpu.memory_space<vmem>>, vector<1x1x256xf32>
    %65 = vector.shape_cast %64 : vector<1x1x256xf32> to vector<1x256xf32>
    %66 = vector.broadcast %65 : vector<1x256xf32> to vector<64x256xf32>
    %67 = arith.addf %63, %66 : vector<64x256xf32>
    %cst_48 = arith.constant 5.000000e-01 : f32
    %68 = vector.broadcast %cst_48 : f32 to vector<64x256xf32>
    %69 = arith.mulf %68, %67 : vector<64x256xf32>
    %70 = math.tanh %69 : vector<64x256xf32>
    %cst_49 = arith.constant 5.000000e-01 : f32
    %71 = vector.broadcast %cst_49 : f32 to vector<64x256xf32>
    %72 = arith.mulf %71, %70 : vector<64x256xf32>
    %cst_50 = arith.constant 5.000000e-01 : f32
    %73 = vector.broadcast %cst_50 : f32 to vector<64x256xf32>
    %74 = arith.addf %72, %73 : vector<64x256xf32>
    %75 = arith.mulf %67, %74 : vector<64x256xf32>
    %c0_51 = arith.constant 0 : index
    %c512_52 = arith.constant 512 : index
    %76 = vector.load %arg9[%c0_51, %c512_52] : memref<1x1280xf32, #tpu.memory_space<vmem>>, vector<1x256xf32>
    %cst_53 = arith.constant dense<0.000000e+00> : vector<256xf32>
    %77 = vector.multi_reduction <add>, %75, %cst_53 [0] : vector<64x256xf32> to vector<256xf32>
    %78 = vector.shape_cast %77 : vector<256xf32> to vector<1x256xf32>
    %79 = arith.addf %76, %78 : vector<1x256xf32>
    %c0_54 = arith.constant 0 : index
    %c512_55 = arith.constant 512 : index
    %80 = vector.load %arg9[%c0_54, %c512_55] : memref<1x1280xf32, #tpu.memory_space<vmem>>, vector<1x256xf32>
    tpu.vector_store %arg9[%c0_54, %c512_55], %79 {strides = array<i32>} : memref<1x1280xf32, #tpu.memory_space<vmem>>, vector<1x256xf32>,
    %c0_56 = arith.constant 0 : index
    %c0_57 = arith.constant 0 : index
    %c768 = arith.constant 768 : index
    %81 = vector.load %arg6[%c0_56, %c0_57, %c768] : memref<1x32x1280xbf16, #tpu.memory_space<vmem>>, vector<1x32x256xbf16>
    %82 = vector.shape_cast %81 : vector<1x32x256xbf16> to vector<32x256xbf16>
    %cst_58 = arith.constant dense<0.000000e+00> : vector<64x256xf32>
    %83 = tpu.matmul %20, %82, %cst_58 {dimension_numbers = #tpu.dot_dimension_numbers<[1], [0], [0], [1], [0, 0, 1, 1], [], []>} : vector<64x32xbf16>, vector<32x256xbf16>, vector<64x256xf32> -> vector<64x256xf32>
    %c0_59 = arith.constant 0 : index
    %c0_60 = arith.constant 0 : index
    %c768_61 = arith.constant 768 : index
    %84 = vector.load %arg7[%c0_59, %c0_60, %c768_61] : memref<1x1x1280xf32, #tpu.memory_space<vmem>>, vector<1x1x256xf32>
    %85 = vector.shape_cast %84 : vector<1x1x256xf32> to vector<1x256xf32>
    %86 = vector.broadcast %85 : vector<1x256xf32> to vector<64x256xf32>
    %87 = arith.addf %83, %86 : vector<64x256xf32>
    %cst_62 = arith.constant 5.000000e-01 : f32
    %88 = vector.broadcast %cst_62 : f32 to vector<64x256xf32>
    %89 = arith.mulf %88, %87 : vector<64x256xf32>
    %90 = math.tanh %89 : vector<64x256xf32>
    %cst_63 = arith.constant 5.000000e-01 : f32
    %91 = vector.broadcast %cst_63 : f32 to vector<64x256xf32>
    %92 = arith.mulf %91, %90 : vector<64x256xf32>
    %cst_64 = arith.constant 5.000000e-01 : f32
    %93 = vector.broadcast %cst_64 : f32 to vector<64x256xf32>
    %94 = arith.addf %92, %93 : vector<64x256xf32>
    %95 = arith.mulf %87, %94 : vector<64x256xf32>
    %c0_65 = arith.constant 0 : index
    %c768_66 = arith.constant 768 : index
    %96 = vector.load %arg9[%c0_65, %c768_66] : memref<1x1280xf32, #tpu.memory_space<vmem>>, vector<1x256xf32>
    %cst_67 = arith.constant dense<0.000000e+00> : vector<256xf32>
    %97 = vector.multi_reduction <add>, %95, %cst_67 [0] : vector<64x256xf32> to vector<256xf32>
    %98 = vector.shape_cast %97 : vector<256xf32> to vector<1x256xf32>
    %99 = arith.addf %96, %98 : vector<1x256xf32>
    %c0_68 = arith.constant 0 : index
    %c768_69 = arith.constant 768 : index
    %100 = vector.load %arg9[%c0_68, %c768_69] : memref<1x1280xf32, #tpu.memory_space<vmem>>, vector<1x256xf32>
    tpu.vector_store %arg9[%c0_68, %c768_69], %99 {strides = array<i32>} : memref<1x1280xf32, #tpu.memory_space<vmem>>, vector<1x256xf32>,
    %c0_70 = arith.constant 0 : index
    %c0_71 = arith.constant 0 : index
    %c1024 = arith.constant 1024 : index
    %101 = vector.load %arg6[%c0_70, %c0_71, %c1024] : memref<1x32x1280xbf16, #tpu.memory_space<vmem>>, vector<1x32x256xbf16>
    %102 = vector.shape_cast %101 : vector<1x32x256xbf16> to vector<32x256xbf16>
    %cst_72 = arith.constant dense<0.000000e+00> : vector<64x256xf32>
    %103 = tpu.matmul %20, %102, %cst_72 {dimension_numbers = #tpu.dot_dimension_numbers<[1], [0], [0], [1], [0, 0, 1, 1], [], []>} : vector<64x32xbf16>, vector<32x256xbf16>, vector<64x256xf32> -> vector<64x256xf32>
    %c0_73 = arith.constant 0 : index
    %c0_74 = arith.constant 0 : index
    %c1024_75 = arith.constant 1024 : index
    %104 = vector.load %arg7[%c0_73, %c0_74, %c1024_75] : memref<1x1x1280xf32, #tpu.memory_space<vmem>>, vector<1x1x256xf32>
    %105 = vector.shape_cast %104 : vector<1x1x256xf32> to vector<1x256xf32>
    %106 = vector.broadcast %105 : vector<1x256xf32> to vector<64x256xf32>
    %107 = arith.addf %103, %106 : vector<64x256xf32>
    %cst_76 = arith.constant 5.000000e-01 : f32
    %108 = vector.broadcast %cst_76 : f32 to vector<64x256xf32>
    %109 = arith.mulf %108, %107 : vector<64x256xf32>
    %110 = math.tanh %109 : vector<64x256xf32>
    %cst_77 = arith.constant 5.000000e-01 : f32
    %111 = vector.broadcast %cst_77 : f32 to vector<64x256xf32>
    %112 = arith.mulf %111, %110 : vector<64x256xf32>
    %cst_78 = arith.constant 5.000000e-01 : f32
    %113 = vector.broadcast %cst_78 : f32 to vector<64x256xf32>
    %114 = arith.addf %112, %113 : vector<64x256xf32>
    %115 = arith.mulf %107, %114 : vector<64x256xf32>
    %c0_79 = arith.constant 0 : index
    %c1024_80 = arith.constant 1024 : index
    %116 = vector.load %arg9[%c0_79, %c1024_80] : memref<1x1280xf32, #tpu.memory_space<vmem>>, vector<1x256xf32>
    %cst_81 = arith.constant dense<0.000000e+00> : vector<256xf32>
    %117 = vector.multi_reduction <add>, %115, %cst_81 [0] : vector<64x256xf32> to vector<256xf32>
    %118 = vector.shape_cast %117 : vector<256xf32> to vector<1x256xf32>
    %119 = arith.addf %116, %118 : vector<1x256xf32>
    %c0_82 = arith.constant 0 : index
    %c1024_83 = arith.constant 1024 : index
    %120 = vector.load %arg9[%c0_82, %c1024_83] : memref<1x1280xf32, #tpu.memory_space<vmem>>, vector<1x256xf32>
    tpu.vector_store %arg9[%c0_82, %c1024_83], %119 {strides = array<i32>} : memref<1x1280xf32, #tpu.memory_space<vmem>>, vector<1x256xf32>,
    %c0_i32_84 = arith.constant 0 : i32
    %121 = arith.cmpi eq, %arg2, %c0_i32_84 : i32
    %122 = arith.extui %121 : i1 to i32
    %c0_i32_85 = arith.constant 0 : i32
    %123 = arith.cmpi ne, %122, %c0_i32_85 : i32
    scf.if %123 {
      %c0_86 = arith.constant 0 : index
      %c0_87 = arith.constant 0 : index
      %124 = vector.load %arg9[%c0_86, %c0_87] : memref<1x1280xf32, #tpu.memory_space<vmem>>, vector<1x1280xf32>
      %cst_88 = arith.constant 1.562500e-02 : f32
      %125 = vector.broadcast %cst_88 : f32 to vector<1x1280xf32>
      %126 = arith.mulf %124, %125 : vector<1x1280xf32>
      %c0_89 = arith.constant 0 : index
      %127 = arith.index_cast %arg1 : i32 to index
      %c0_90 = arith.constant 0 : index
      %128 = vector.load %arg8[%c0_89, %127, %c0_90] : memref<1x2x1280xf32, #tpu.memory_space<vmem>>, vector<1x1x1280xf32>
      %129 = vector.shape_cast %128 : vector<1x1x1280xf32> to vector<1x1280xf32>
      %130 = vector.shape_cast %126 : vector<1x1280xf32> to vector<1x1x1280xf32>
      tpu.vector_store %arg8[%c0_89, %127, %c0_90], %130 {strides = array<i32>} : memref<1x2x1280xf32, #tpu.memory_space<vmem>>, vector<1x1x1280xf32>,
    } else {
    }
    return
  }
  func.func @transform_0(%arg0: i32, %arg1: i32, %arg2: i32) -> (i32, i32, i32, i32) {
    %c0_i32 = arith.constant 0 : i32
    %c0_i32_0 = arith.constant 0 : i32
    return %arg0, %arg1, %arg2, %c0_i32 : i32, i32, i32, i32
  }
  func.func @transform_1(%arg0: i32, %arg1: i32, %arg2: i32) -> (i32, i32, i32) {
    %c0_i32 = arith.constant 0 : i32
    %c0_i32_0 = arith.constant 0 : i32
    %c0_i32_1 = arith.constant 0 : i32
    return %arg0, %c0_i32, %c0_i32_0 : i32, i32, i32
  }
  func.func @transform_2(%arg0: i32, %arg1: i32, %arg2: i32) -> (i32, i32, i32) {
    %c0_i32 = arith.constant 0 : i32
    %c0_i32_0 = arith.constant 0 : i32
    %c0_i32_1 = arith.constant 0 : i32
    return %arg0, %c0_i32, %c0_i32_0 : i32, i32, i32
  }
  func.func @transform_3(%arg0: i32, %arg1: i32, %arg2: i32) -> (i32, i32, i32) {
    %c0_i32 = arith.constant 0 : i32
    %c0_i32_0 = arith.constant 0 : i32
    %c0_i32_1 = arith.constant 0 : i32
    return %arg0, %c0_i32, %c0_i32_0 : i32, i32, i32
  }
  func.func @transform_4(%arg0: i32, %arg1: i32, %arg2: i32) -> (i32, i32, i32) {
    %c0_i32 = arith.constant 0 : i32
    %c0_i32_0 = arith.constant 0 : i32
    %c0_i32_1 = arith.constant 0 : i32
    return %arg0, %c0_i32, %c0_i32_0 : i32, i32, i32
  }
  func.func @transform_5(%arg0: i32, %arg1: i32, %arg2: i32) -> (i32, i32, i32) {
    %c0_i32 = arith.constant 0 : i32
    %c0_i32_0 = arith.constant 0 : i32
    %c0_i32_1 = arith.constant 0 : i32
    return %arg0, %c0_i32, %c0_i32_0 : i32, i32, i32
  }
}

</mosaic_0001>

<llo_original>
// kernel: enet_hydra_forward.1
$region0: #{enet_hydra_forward.1}
  #allocation0 [shape = 'u32[]', space=smem, size = 0x4, offset = 0x4, fixed_abs, tag = 'smem constant byte address 0x4 - core index']
  #allocation1 [shape = 'u32[144,128]{1,0:T(1,128)}', space=vmem, size = 0x12000, scoped, tag = 'internal scratch']
  #allocation2 [shape = 'f32[1,1280]{1,0:T(1,128)}', space=vmem, size = 0x1400, scoped, tag = 'scratch operand']
  %s0 = inlined_call_operand.vmem [shape: f32[2,2,64,9], index: 0, kind: input, shape index: {}]
  %s1 = inlined_call_operand.vmem [shape: f32[2,9,32], index: 1, kind: input, shape index: {}]
  %s2 = inlined_call_operand.vmem [shape: f32[2,1,32], index: 2, kind: input, shape index: {}]
  %s3 = inlined_call_operand.vmem [shape: bf16[2,32,1280], index: 3, kind: input, shape index: {}]
  %s4 = inlined_call_operand.vmem [shape: f32[2,1,1280], index: 4, kind: input, shape index: {}]
  %s5 = inlined_call_operand.vmem [shape: f32[2,2,1280], index: 5, kind: output, shape index: {}]
  %s6 = sld [smem:[#allocation0]]
  $region61: #{enet_hydra_forward.1} parent=0
    _
  %s8 = ssub.s32 1, %s6
  %s9 = scalar_select 0, %s8, %s6
  loop: start=0, step=1, limit=6
  $region2: #{enet_hydra_forward.1} parent=0 // loop_pre_header
    _
  $region3: #{enet_hydra_forward.1} parent=0 // loop_header
    %s11 = sphi 0, %s15
    %p12 = scmp.ge.s32.totalorder %s11, 6
    %s18 = sphi 0, %s37
    %s19 = sphi 0, %s33
    %s20 = sphi 0, %s29
    %s21 = sphi 0, %s18
    %s22 = sphi 0, %s19
    %s23 = sphi 0, %s20
    %s24 = sphi 0, %s21
    %s25 = sphi 0, %s22
    %s26 = sphi 0, %s23
    %s44 = sphi 0, %s46
    %s47 = sphi 0, %s44
    %s48 = sphi 0, %s47
    %s64 = sphi 0, %s48
    %s70 = sphi 0, %s72
    %s73 = sphi 0, %s70
    %s74 = sphi 0, %s73
    %s90 = sphi 0, %s74
    %s96 = sphi 0, %s98
    %s99 = sphi 0, %s96
    %s100 = sphi 0, %s99
    %s116 = sphi 0, %s100
    %s122 = sphi 0, %s124
    %s125 = sphi 0, %s122
    %s126 = sphi 0, %s125
    %s142 = sphi 0, %s126
    %s148 = sphi 0, %s150
    %s151 = sphi 0, %s148
    %s152 = sphi 0, %s151
    %s168 = sphi 0, %s152
    %s174 = sphi 0, %s176
    %s177 = sphi 0, %s174
    %s178 = sphi 0, %s177
    %s194 = sphi 0, %s178
  $region4: #{enet_hydra_forward.1} parent=0 // loop_header_branch
    %14 = sbr.rel (%p12) target = $region8
  $region5: #{enet_hydra_forward.1} parent=0 // loop_body
    %s16 = ssub.s32 %s11, 1
    %s17 = ssub.s32 %s11, 2
    %s27 = sadd.s32 1, %s20
    %p28 = scmp.ge.s32.totalorder %s27, 1
    %s29 = scalar_select %p28, 0, %s27
    %s30 = sadd.s32 1, %s19
    %s31 = scalar_select %p28, %s30, %s19
    %p32 = scmp.ge.s32.totalorder %s31, 2
    %s33 = scalar_select %p32, 0, %s31
    %s34 = sadd.s32 1, %s18
    %s35 = scalar_select %p32, %s34, %s18
    %p36 = scmp.ge.s32.totalorder %s35, 2
    %s37 = scalar_select %p36, 0, %s35
    %s38 = ssub.s32 %s18, %s37
    %s39 = ssub.s32 %s19, %s33
    %s40 = sor.u32 %s38, %s39
    %s41 = ssub.s32 %s20, %s29
    %s42 = sor.u32 %s40, %s41
    %p43 = scmp.eq.s32.totalorder %s42, 0
    %s45 = sadd.s32 %s44, 1
    %s46 = scalar_select %p43, %s44, %s45
    %p49 = pneg %p43
    %p50 = scmp.eq.s32.totalorder %s11, 3
    %p51 = por %p49, %p50
    %p52 = scmp.ne.s32.totalorder %s44, %s47
    %p53 = scmp.eq.s32.totalorder %s11, 0
    %p54 = por %p52, %p53
    %p55 = scmp.ne.s32.totalorder %s44, %s47
    %p56 = scmp.eq.s32.totalorder %s16, 3
    %p57 = por %p55, %p56
    %p58 = scmp.ne.s32.totalorder %s47, %s48
    %p59 = scmp.eq.s32.totalorder %s16, 0
    %p60 = por %p58, %p59
    %p61 = scmp.ne.s32.totalorder %s47, %s48
    %p62 = scmp.eq.s32.totalorder %s17, 3
    %p63 = por %p61, %p62
    %p65 = scmp.ne.s32.totalorder %s48, %s64
    %p66 = scmp.eq.s32.totalorder %s17, 0
    %p67 = por %p65, %p66
    %s68 = ssub.s32 %s18, %s37
    %p69 = scmp.eq.s32.totalorder %s68, 0
    %s71 = sadd.s32 %s70, 1
    %s72 = scalar_select %p69, %s70, %s71
    %p75 = pneg %p69
    %p76 = scmp.eq.s32.totalorder %s11, 3
    %p77 = por %p75, %p76
    %p78 = scmp.ne.s32.totalorder %s70, %s73
    %p79 = scmp.eq.s32.totalorder %s11, 0
    %p80 = por %p78, %p79
    %p81 = scmp.ne.s32.totalorder %s70, %s73
    %p82 = scmp.eq.s32.totalorder %s16, 3
    %p83 = por %p81, %p82
    %p84 = scmp.ne.s32.totalorder %s73, %s74
    %p85 = scmp.eq.s32.totalorder %s16, 0
    %p86 = por %p84, %p85
    %p87 = scmp.ne.s32.totalorder %s73, %s74
    %p88 = scmp.eq.s32.totalorder %s17, 3
    %p89 = por %p87, %p88
    %p91 = scmp.ne.s32.totalorder %s74, %s90
    %p92 = scmp.eq.s32.totalorder %s17, 0
    %p93 = por %p91, %p92
    %s94 = ssub.s32 %s18, %s37
    %p95 = scmp.eq.s32.totalorder %s94, 0
    %s97 = sadd.s32 %s96, 1
    %s98 = scalar_select %p95, %s96, %s97
    %p101 = pneg %p95
    %p102 = scmp.eq.s32.totalorder %s11, 3
    %p103 = por %p101, %p102
    %p104 = scmp.ne.s32.totalorder %s96, %s99
    %p105 = scmp.eq.s32.totalorder %s11, 0
    %p106 = por %p104, %p105
    %p107 = scmp.ne.s32.totalorder %s96, %s99
    %p108 = scmp.eq.s32.totalorder %s16, 3
    %p109 = por %p107, %p108
    %p110 = scmp.ne.s32.totalorder %s99, %s100
    %p111 = scmp.eq.s32.totalorder %s16, 0
    %p112 = por %p110, %p111
    %p113 = scmp.ne.s32.totalorder %s99, %s100
    %p114 = scmp.eq.s32.totalorder %s17, 3
    %p115 = por %p113, %p114
    %p117 = scmp.ne.s32.totalorder %s100, %s116
    %p118 = scmp.eq.s32.totalorder %s17, 0
    %p119 = por %p117, %p118
    %s120 = ssub.s32 %s18, %s37
    %p121 = scmp.eq.s32.totalorder %s120, 0
    %s123 = sadd.s32 %s122, 1
    %s124 = scalar_select %p121, %s122, %s123
    %p127 = pneg %p121
    %p128 = scmp.eq.s32.totalorder %s11, 3
    %p129 = por %p127, %p128
    %p130 = scmp.ne.s32.totalorder %s122, %s125
    %p131 = scmp.eq.s32.totalorder %s11, 0
    %p132 = por %p130, %p131
    %p133 = scmp.ne.s32.totalorder %s122, %s125
    %p134 = scmp.eq.s32.totalorder %s16, 3
    %p135 = por %p133, %p134
    %p136 = scmp.ne.s32.totalorder %s125, %s126
    %p137 = scmp.eq.s32.totalorder %s16, 0
    %p138 = por %p136, %p137
    %p139 = scmp.ne.s32.totalorder %s125, %s126
    %p140 = scmp.eq.s32.totalorder %s17, 3
    %p141 = por %p139, %p140
    %p143 = scmp.ne.s32.totalorder %s126, %s142
    %p144 = scmp.eq.s32.totalorder %s17, 0
    %p145 = por %p143, %p144
    %s146 = ssub.s32 %s18, %s37
    %p147 = scmp.eq.s32.totalorder %s146, 0
    %s149 = sadd.s32 %s148, 1
    %s150 = scalar_select %p147, %s148, %s149
    %p153 = pneg %p147
    %p154 = scmp.eq.s32.totalorder %s11, 3
    %p155 = por %p153, %p154
    %p156 = scmp.ne.s32.totalorder %s148, %s151
    %p157 = scmp.eq.s32.totalorder %s11, 0
    %p158 = por %p156, %p157
    %p159 = scmp.ne.s32.totalorder %s148, %s151
    %p160 = scmp.eq.s32.totalorder %s16, 3
    %p161 = por %p159, %p160
    %p162 = scmp.ne.s32.totalorder %s151, %s152
    %p163 = scmp.eq.s32.totalorder %s16, 0
    %p164 = por %p162, %p163
    %p165 = scmp.ne.s32.totalorder %s151, %s152
    %p166 = scmp.eq.s32.totalorder %s17, 3
    %p167 = por %p165, %p166
    %p169 = scmp.ne.s32.totalorder %s152, %s168
    %p170 = scmp.eq.s32.totalorder %s17, 0
    %p171 = por %p169, %p170
    %s172 = ssub.s32 %s18, %s37
    %p173 = scmp.eq.s32.totalorder %s172, 0
    %s175 = sadd.s32 %s174, 1
    %s176 = scalar_select %p173, %s174, %s175
    %p179 = pneg %p173
    %p180 = scmp.eq.s32.totalorder %s11, 3
    %p181 = por %p179, %p180
    %p182 = scmp.ne.s32.totalorder %s174, %s177
    %p183 = scmp.eq.s32.totalorder %s11, 0
    %p184 = por %p182, %p183
    %p185 = scmp.ne.s32.totalorder %s174, %s177
    %p186 = scmp.eq.s32.totalorder %s16, 3
    %p187 = por %p185, %p186
    %p188 = scmp.ne.s32.totalorder %s177, %s178
    %p189 = scmp.eq.s32.totalorder %s16, 0
    %p190 = por %p188, %p189
    %p191 = scmp.ne.s32.totalorder %s177, %s178
    %p192 = scmp.eq.s32.totalorder %s17, 3
    %p193 = por %p191, %p192
    %p195 = scmp.ne.s32.totalorder %s178, %s194
    %p196 = scmp.eq.s32.totalorder %s17, 0
    %p197 = por %p195, %p196
    %p198 = scmp.le.s32.totalorder 1, %s11
    %p199 = scmp.lt.s32.totalorder %s11, 5
    %p200 = pnand %p198, %p199
    %p201 = pneg %p200
    // Predicated region
    $region9: #{enet_hydra_forward.1} parent=5 // pred_check
      _
    $region10: #{enet_hydra_forward.1} parent=5 // pred_check_branch
      %203 = sbr.rel (%p200) target = $region12
    $region11: #{enet_hydra_forward.1} parent=5 // pred_region
      %s204 = ssub.s32 %s11, 1
    $region12: #{enet_hydra_forward.1} parent=5 // pred_fallthru
      _
    %p205 = scmp.lt.s32.totalorder %s11, 4
    // Predicated region
    $region13: #{enet_hydra_forward.1} parent=5 // pred_check
      %p206 = pneg %p205
    $region14: #{enet_hydra_forward.1} parent=5 // pred_check_branch
      %208 = sbr.rel (%p206) target = $region16
    $region15: #{enet_hydra_forward.1} parent=5 // pred_region
      // Predicated region
      $region17: #{enet_hydra_forward.1} parent=15 // pred_check
        %p209 = pneg %p54
      $region18: #{enet_hydra_forward.1} parent=15 // pred_check_branch
        %211 = sbr.rel (%p209) target = $region20
      $region19: #{enet_hydra_forward.1} parent=15 // pred_region
        %s212 = smul.u32 8, %s20
        %p213 = scmp.lt.s32.totalorder %s18, 1
        %s214 = scalar_select %p213, %s18, 1
        %p215 = scmp.lt.s32.totalorder %s19, 1
        %s216 = scalar_select %p215, %s19, 1
        %p217 = scmp.lt.s32.totalorder %s212, 7
        %s218 = scalar_select %p217, %s212, 7
        %s219 = smul.addr %s216, 8
        %s220 = sadd.s32 %s218, %s219
        %s221 = smul.addr %s214, 16
        %s222 = sadd.s32 %s220, %s221
        %s223 = smul.addr %s222, 8
        %s224 = scalar_lea.vmem %s0, %s223
        %s225 = smul.u32 8, %s20
      $region20: #{enet_hydra_forward.1} parent=15 // pred_fallthru
        _
      // Predicated region
      $region21: #{enet_hydra_forward.1} parent=15 // pred_check
        %p226 = pneg %p80
      $region22: #{enet_hydra_forward.1} parent=15 // pred_check_branch
        %228 = sbr.rel (%p226) target = $region24
      $region23: #{enet_hydra_forward.1} parent=15 // pred_region
        %p229 = scmp.lt.s32.totalorder %s18, 1
        %s230 = scalar_select %p229, %s18, 1
        %s231 = smul.addr %s230, 2
        %s232 = smul.addr %s231, 8
        %s233 = scalar_lea.vmem %s1, %s232
      $region24: #{enet_hydra_forward.1} parent=15 // pred_fallthru
        _
      // Predicated region
      $region25: #{enet_hydra_forward.1} parent=15 // pred_check
        %p234 = pneg %p106
      $region26: #{enet_hydra_forward.1} parent=15 // pred_check_branch
        %236 = sbr.rel (%p234) target = $region28
      $region27: #{enet_hydra_forward.1} parent=15 // pred_region
        %p237 = scmp.lt.s32.totalorder %s18, 1
        %s238 = scalar_select %p237, %s18, 1
        %s239 = scalar_lea.vmem %s2, %s238
      $region28: #{enet_hydra_forward.1} parent=15 // pred_fallthru
        _
      // Predicated region
      $region29: #{enet_hydra_forward.1} parent=15 // pred_check
        %p240 = pneg %p132
      $region30: #{enet_hydra_forward.1} parent=15 // pred_check_branch
        %242 = sbr.rel (%p240) target = $region32
      $region31: #{enet_hydra_forward.1} parent=15 // pred_region
        %p243 = scmp.lt.s32.totalorder %s18, 1
        %s244 = scalar_select %p243, %s18, 1
        %s245 = smul.addr %s244, 40
        %s246 = smul.addr %s245, 4
        %s247 = scalar_lea.vmem %s3, %s246
      $region32: #{enet_hydra_forward.1} parent=15 // pred_fallthru
        _
      // Predicated region
      $region33: #{enet_hydra_forward.1} parent=15 // pred_check
        %p248 = pneg %p158
      $region34: #{enet_hydra_forward.1} parent=15 // pred_check_branch
        %250 = sbr.rel (%p248) target = $region36
      $region35: #{enet_hydra_forward.1} parent=15 // pred_region
        %p251 = scmp.lt.s32.totalorder %s18, 1
        %s252 = scalar_select %p251, %s18, 1
        %s253 = smul.addr %s252, 10
        %s254 = scalar_lea.vmem %s4, %s253
      $region36: #{enet_hydra_forward.1} parent=15 // pred_fallthru
        _
    $region16: #{enet_hydra_forward.1} parent=5 // pred_fallthru
      _
    %p255 = scmp.le.s32.totalorder 1, %s11
    %p256 = scmp.lt.s32.totalorder %s11, 5
    %p257 = pnand %p255, %p256
    %p258 = pneg %p257
    // Predicated region
    $region37: #{enet_hydra_forward.1} parent=5 // pred_check
      _
    $region38: #{enet_hydra_forward.1} parent=5 // pred_check_branch
      %260 = sbr.rel (%p257) target = $region40
    $region39: #{enet_hydra_forward.1} parent=5 // pred_region
      %s261 = ssub.s32 %s11, 1
      %s262 = smul.u32 8, %s23
      %p263 = scmp.lt.s32.totalorder %s21, 1
      %s264 = scalar_select %p263, %s21, 1
      %p265 = scmp.lt.s32.totalorder %s22, 1
      %s266 = scalar_select %p265, %s22, 1
      %p267 = scmp.lt.s32.totalorder %s262, 7
      %s268 = scalar_select %p267, %s262, 7
      %s269 = smul.addr %s266, 8
      %s270 = sadd.s32 %s268, %s269
      %s271 = smul.addr %s264, 16
      %s272 = sadd.s32 %s270, %s271
      %s273 = smul.addr %s272, 8
      %s274 = scalar_lea.vmem %s0, %s273
      %p275 = pneg %p60
      %p276 = pneg %p57
      %p277 = scmp.lt.s32.totalorder %s21, 1
      %s278 = scalar_select %p277, %s21, 1
      %s279 = smul.addr %s278, 2
      %s280 = smul.addr %s279, 8
      %s281 = scalar_lea.vmem %s1, %s280
      %p282 = pneg %p86
      %p283 = pneg %p83
      %p284 = scmp.lt.s32.totalorder %s21, 1
      %s285 = scalar_select %p284, %s21, 1
      %s286 = scalar_lea.vmem %s2, %s285
      %p287 = pneg %p112
      %p288 = pneg %p109
      %p289 = scmp.lt.s32.totalorder %s21, 1
      %s290 = scalar_select %p289, %s21, 1
      %s291 = smul.addr %s290, 40
      %s292 = smul.addr %s291, 4
      %s293 = scalar_lea.vmem %s3, %s292
      %p294 = pneg %p138
      %p295 = pneg %p135
      %p296 = scmp.lt.s32.totalorder %s21, 1
      %s297 = scalar_select %p296, %s21, 1
      %s298 = smul.addr %s297, 10
      %s299 = scalar_lea.vmem %s4, %s298
      %p300 = pneg %p164
      %p301 = pneg %p161
      %p302 = pneg %p190
      %p303 = pneg %p187
      %p304 = scmp.lt.s32.totalorder %s21, 1
      %s305 = scalar_select %p304, %s21, 1
      %s306 = smul.addr %s305, 10
      %s307 = smul.addr %s306, 2
      %s308 = scalar_lea.vmem %s5, %s307
      %s309 = smul.u32 8, %s23
      %p310 = scmp.lt.s32.totalorder %s21, 1
      %s311 = scalar_select %p310, %s21, 1
      %p312 = scmp.lt.s32.totalorder %s22, 1
      %s313 = scalar_select %p312, %s22, 1
      %p314 = scmp.lt.s32.totalorder %s309, 7
      %s315 = scalar_select %p314, %s309, 7
      %s316 = smul.addr %s313, 8
      %s317 = sadd.s32 %s315, %s316
      %s318 = smul.addr %s311, 16
      %s319 = sadd.s32 %s317, %s318
      %s320 = smul.addr %s319, 8
      %s321 = scalar_lea.vmem %s0, %s320
      %s322 = smul.u32 8, %s23
      %p323 = scmp.lt.s32.totalorder %s21, 1
      %s324 = scalar_select %p323, %s21, 1
      %s325 = smul.addr %s324, 2
      %s326 = smul.addr %s325, 8
      %s327 = scalar_lea.vmem %s1, %s326
      %p328 = scmp.lt.s32.totalorder %s21, 1
      %s329 = scalar_select %p328, %s21, 1
      %s330 = scalar_lea.vmem %s2, %s329
      %p331 = scmp.lt.s32.totalorder %s21, 1
      %s332 = scalar_select %p331, %s21, 1
      %s333 = smul.addr %s332, 40
      %s334 = smul.addr %s333, 4
      %s335 = scalar_lea.vmem %s3, %s334
      %p336 = scmp.lt.s32.totalorder %s21, 1
      %s337 = scalar_select %p336, %s21, 1
      %s338 = smul.addr %s337, 10
      %s339 = scalar_lea.vmem %s4, %s338
      %p340 = scmp.lt.s32.totalorder %s21, 1
      %s341 = scalar_select %p340, %s21, 1
      %s342 = smul.addr %s341, 10
      %s343 = smul.addr %s342, 2
      %s344 = scalar_lea.vmem %s5, %s343
      %p346 = scmp.eq.s32.totalorder %s23, 0
      // Predicated region
      $region41: #{enet_hydra_forward.1} parent=39 // pred_check
        %p347 = pneg %p346
      $region42: #{enet_hydra_forward.1} parent=39 // pred_check_branch
        %349 = sbr.rel (%p347) target = $region44
      $region43: #{enet_hydra_forward.1} parent=39 // pred_region
        %350 = vst [vmem:[#allocation2] sm:$0xff] 0.0
        %v351 = vlaneseq
        %vm352 = vcmp.ge.s32.totalorder %v351, 0
        %vm353 = vcmp.lt.s32.totalorder %v351, 256
        %vm354 = vmand %vm352, %vm353
        %355 = vst.msk [vmem:[#allocation2 + $0x8] sm:$0x3] %vm354, 0.0
      $region44: #{enet_hydra_forward.1} parent=39 // pred_fallthru
        _
      %v356 = vld [vmem:[%s321] sm:$0xff]
      %v357 = vld [vmem:[%s321 + $0x8] sm:$0xff]
      %v358 = vld [vmem:[%s321 + $0x10] sm:$0xff]
      %v359 = vld [vmem:[%s321 + $0x18] sm:$0xff]
      %v360 = vld [vmem:[%s321 + $0x20] sm:$0xff]
      %v361 = vld [vmem:[%s321 + $0x28] sm:$0xff]
      %v362 = vld [vmem:[%s321 + $0x30] sm:$0xff]
      %v363 = vld [vmem:[%s321 + $0x38] sm:$0xff]
      %v364 = vld [vmem:[%s327] sm:$0xff]
      %v365 = vld [vmem:[%s327 + $0x8] sm:$0x1]
      %v366 = vld [vmem:[%s330] sm:$0x1]
      %v368 = vlaneseq
      %v369 = vshrl.u32 %v368, 7
      %v370 = vsub.s32 0, %v369
      %v371 = vrot.slane %v366, %v370
      %vm373 = vcmask 72704
      %v375 = vsel %vm373, %v356, 0
      %v378 = vsel %vm373, %v357, 0
      %v381 = vsel %vm373, %v358, 0
      %v384 = vsel %vm373, %v359, 0
      %v387 = vsel %vm373, %v360, 0
      %v390 = vsel %vm373, %v361, 0
      %v393 = vsel %vm373, %v362, 0
      %v396 = vsel %vm373, %v363, 0
      %vm398 = vcmask 1040384
      %v400 = vsel %vm398, %v365, 0
      %402 = vmatprep.subr.mxu0 0.0
      %403 = vmatpush1.msra.mxu0 %v364
      %404 = vmatprep.subr.mxu0 0.0
      %405 = vmatpush1.msra.mxu0 %v400
      %406 = vmatprep.subr.mxu0 0.0
      %407 = vmatpush1.msra.mxu0 0.0
      %408 = vmatprep.subr.mxu0 0.0
      %409 = vmatpush1.msra.mxu0 0.0
      %410 = vmatprep.subr.mxu0 0.0
      %411 = vmatpush1.msra.mxu0 0.0
      %412 = vmatprep.subr.mxu0 0.0
      %413 = vmatpush1.msra.mxu0 0.0
      %414 = vmatprep.subr.mxu0 0.0
      %415 = vmatpush1.msra.mxu0 0.0
      %416 = vmatprep.subr.mxu0 0.0
      %417 = vmatpush1.msra.mxu0 0.0
      %418 = vmatprep.subr.mxu0 0.0
      %419 = vmatpush1.msra.mxu0 0.0
      %420 = vmatprep.subr.mxu0 0.0
      %421 = vmatpush1.msra.mxu0 0.0
      %422 = vmatprep.subr.mxu0 0.0
      %423 = vmatpush1.msra.mxu0 0.0
      %424 = vmatprep.subr.mxu0 0.0
      %425 = vmatpush1.msra.mxu0 0.0
      %426 = vmatprep.subr.mxu0 0.0
      %427 = vmatpush1.msra.mxu0 0.0
      %428 = vmatprep.subr.mxu0 0.0
      %429 = vmatpush1.msra.mxu0 0.0
      %430 = vmatprep.subr.mxu0 0.0
      %431 = vmatpush1.msra.mxu0 0.0
      %432 = vmatprep.subr.mxu0 0.0
      %433 = vmatpush1.msra.mxu0 0.0
      %434 = vmatprep.subr.mxu0 0.0
      %435 = vmatpush1.msra.mxu0 0.0
      %436 = vmatprep.subr.mxu0 0.0
      %437 = vmatpush1.msra.mxu0 0.0
      %438 = vmatprep.subr.mxu0 0.0
      %439 = vmatpush1.msra.mxu0 0.0
      %440 = vmatprep.subr.mxu0 0.0
      %441 = vmatpush1.msra.mxu0 0.0
      %442 = vmatprep.subr.mxu0 0.0
      %443 = vmatpush1.msra.mxu0 0.0
      %444 = vmatprep.subr.mxu0 0.0
      %445 = vmatpush1.msra.mxu0 0.0
      %446 = vmatprep.subr.mxu0 0.0
      %447 = vmatpush1.msra.mxu0 0.0
      %448 = vmatprep.subr.mxu0 0.0
      %449 = vmatpush1.msra.mxu0 0.0
      %450 = vmatprep.subr.mxu0 0.0
      %451 = vmatpush1.msra.mxu0 0.0
      %452 = vmatprep.subr.mxu0 0.0
      %453 = vmatpush1.msra.mxu0 0.0
      %454 = vmatprep.subr.mxu0 0.0
      %455 = vmatpush1.msra.mxu0 0.0
      %456 = vmatprep.subr.mxu0 0.0
      %457 = vmatpush1.msra.mxu0 0.0
      %458 = vmatprep.subr.mxu0 0.0
      %459 = vmatpush1.msra.mxu0 0.0
      %460 = vmatprep.subr.mxu0 0.0
      %461 = vmatpush1.msra.mxu0 0.0
      %462 = vmatprep.subr.mxu0 0.0
      %463 = vmatpush1.msra.mxu0 0.0
      %464 = vmatprep.subr.mxu0 0.0
      %465 = vmatpush1.msra.mxu0 0.0
      %466 = vmatprep.mubr.f32.mxu0 0.0
      %467 = vmatmul.mubr.f32.gmra.mrb[0].mxu0 %v375
      %v468 = vpop.f32.mrb[0].mxu0
      %v469 = vadd.f32 %v371, %v468
      %v470 = vpop.f32.mrb[0].mxu0
      %471 = vmatprep.mubr.f32.mxu0 0.0
      %472 = vmatmul.mubr.f32.gmra.mrb[0].mxu0 %v378
      %v473 = vpop.f32.mrb[0].mxu0
      %v474 = vadd.f32 %v371, %v473
      %v475 = vpop.f32.mrb[0].mxu0
      %476 = vmatprep.mubr.f32.mxu0 0.0
      %477 = vmatmul.mubr.f32.gmra.mrb[0].mxu0 %v381
      %v478 = vpop.f32.mrb[0].mxu0
      %v479 = vadd.f32 %v371, %v478
      %v480 = vpop.f32.mrb[0].mxu0
      %481 = vmatprep.mubr.f32.mxu0 0.0
      %482 = vmatmul.mubr.f32.gmra.mrb[0].mxu0 %v384
      %v483 = vpop.f32.mrb[0].mxu0
      %v484 = vadd.f32 %v371, %v483
      %v485 = vpop.f32.mrb[0].mxu0
      %486 = vmatprep.mubr.f32.mxu0 0.0
      %487 = vmatmul.mubr.f32.gmra.mrb[0].mxu0 %v387
      %v488 = vpop.f32.mrb[0].mxu0
      %v489 = vadd.f32 %v371, %v488
      %v490 = vpop.f32.mrb[0].mxu0
      %491 = vmatprep.mubr.f32.mxu0 0.0
      %492 = vmatmul.mubr.f32.gmra.mrb[0].mxu0 %v390
      %v493 = vpop.f32.mrb[0].mxu0
      %v494 = vadd.f32 %v371, %v493
      %v495 = vpop.f32.mrb[0].mxu0
      %496 = vmatprep.mubr.f32.mxu0 0.0
      %497 = vmatmul.mubr.f32.gmra.mrb[0].mxu0 %v393
      %v498 = vpop.f32.mrb[0].mxu0
      %v499 = vadd.f32 %v371, %v498
      %v500 = vpop.f32.mrb[0].mxu0
      %501 = vmatprep.mubr.f32.mxu0 0.0
      %502 = vmatmul.mubr.f32.gmra.mrb[0].mxu0 %v396
      %v503 = vpop.f32.mrb[0].mxu0
      %v504 = vadd.f32 %v371, %v503
      %v505 = vpop.f32.mrb[0].mxu0
      %506 = vdwg.mxu0
      %v507 = vmul.f32 %v469, 0.5
      %v508 = vmul.f32 %v474, 0.5
      %v509 = vmul.f32 %v479, 0.5
      %v510 = vmul.f32 %v484, 0.5
      %v511 = vmul.f32 %v489, 0.5
      %v512 = vmul.f32 %v494, 0.5
      %v513 = vmul.f32 %v499, 0.5
      %v514 = vmul.f32 %v504, 0.5
      %v515 = vtanh.pop %v507
      %v516 = vtanh.pop %v508
      %v517 = vtanh.pop %v509
      %v518 = vtanh.pop %v510
      %v519 = vtanh.pop %v511
      %v520 = vtanh.pop %v512
      %v521 = vtanh.pop %v513
      %v522 = vtanh.pop %v514
      %v523 = vmul.f32 %v515, 0.5
      %v524 = vmul.f32 %v516, 0.5
      %v525 = vmul.f32 %v517, 0.5
      %v526 = vmul.f32 %v518, 0.5
      %v527 = vmul.f32 %v519, 0.5
      %v528 = vmul.f32 %v520, 0.5
      %v529 = vmul.f32 %v521, 0.5
      %v530 = vmul.f32 %v522, 0.5
      %v531 = vadd.f32 %v523, 0.5
      %v532 = vadd.f32 %v524, 0.5
      %v533 = vadd.f32 %v525, 0.5
      %v534 = vadd.f32 %v526, 0.5
      %v535 = vadd.f32 %v527, 0.5
      %v536 = vadd.f32 %v528, 0.5
      %v537 = vadd.f32 %v529, 0.5
      %v538 = vadd.f32 %v530, 0.5
      %v539 = vmul.f32 %v469, %v531
      %v540 = vmul.f32 %v474, %v532
      %v541 = vmul.f32 %v479, %v533
      %v542 = vmul.f32 %v484, %v534
      %v543 = vmul.f32 %v489, %v535
      %v544 = vmul.f32 %v494, %v536
      %v545 = vmul.f32 %v499, %v537
      %v546 = vmul.f32 %v504, %v538
      %v547 = vpack.c.bf16 %v540, %v539
      %v548 = vpack.c.bf16 %v542, %v541
      %v549 = vpack.c.bf16 %v544, %v543
      %v550 = vpack.c.bf16 %v546, %v545
      %v551 = vld [vmem:[%s335] sm:$0xff]
      %v552 = vld [vmem:[%s335 + $0x28] sm:$0xff]
      %v553 = vld [vmem:[%s335 + $0x50] sm:$0xff]
      %v554 = vld [vmem:[%s335 + $0x78] sm:$0xff]
      %v555 = vld [vmem:[%s339] sm:$0x3]
      %v557 = vlaneseq
      %v558 = vshrl.u32 %v557, 7
      %v559 = vsub.s32 0, %v558
      %v560 = vrot.slane %v555, %v559
      %v561 = vlaneseq
      %v562 = vshrl.u32 %v561, 7
      %v563 = vsub.s32 1, %v562
      %v564 = vrot.slane %v555, %v563
      %v571 = vunpack.c.l.b16 %v551
      %v572 = vunpack.c.h.b16 %v551
      %v573 = vunpack.c.l.b16 %v552
      %v574 = vunpack.c.h.b16 %v552
      %v575 = vunpack.c.l.b16 %v553
      %v576 = vunpack.c.h.b16 %v553
      %v577 = vunpack.c.l.b16 %v554
      %v578 = vunpack.c.h.b16 %v554
      %v579 = vpack.c.b16 %v573, %v571
      %v580 = vpack.c.b16 %v574, %v572
      %v581 = vpack.c.b16 %v577, %v575
      %v582 = vpack.c.b16 %v578, %v576
      %vm587 = vcmask 261120
      %v589 = vsel %vm587, %v547, 0
      %v592 = vsel %vm587, %v548, 0
      %v595 = vsel %vm587, %v549, 0
      %v598 = vsel %vm587, %v550, 0
      %600 = vmatprep.subr.bf16.mxu0 %v580
      %601 = vmatpush1.bf16.msra.mxu0 %v579
      %602 = vmatprep.subr.bf16.mxu0 %v582
      %603 = vmatpush1.bf16.msra.mxu0 %v581
      %604 = vmatprep.subr.bf16.mxu0 0
      %605 = vmatpush1.bf16.msra.mxu0 0
      %606 = vmatprep.subr.bf16.mxu0 0
      %607 = vmatpush1.bf16.msra.mxu0 0
      %608 = vmatprep.subr.bf16.mxu0 0
      %609 = vmatpush1.bf16.msra.mxu0 0
      %610 = vmatprep.subr.bf16.mxu0 0
      %611 = vmatpush1.bf16.msra.mxu0 0
      %612 = vmatprep.subr.bf16.mxu0 0
      %613 = vmatpush1.bf16.msra.mxu0 0
      %614 = vmatprep.subr.bf16.mxu0 0
      %615 = vmatpush1.bf16.msra.mxu0 0
      %616 = vmatprep.subr.bf16.mxu0 0
      %617 = vmatpush1.bf16.msra.mxu0 0
      %618 = vmatprep.subr.bf16.mxu0 0
      %619 = vmatpush1.bf16.msra.mxu0 0
      %620 = vmatprep.subr.bf16.mxu0 0
      %621 = vmatpush1.bf16.msra.mxu0 0
      %622 = vmatprep.subr.bf16.mxu0 0
      %623 = vmatpush1.bf16.msra.mxu0 0
      %624 = vmatprep.subr.bf16.mxu0 0
      %625 = vmatpush1.bf16.msra.mxu0 0
      %626 = vmatprep.subr.bf16.mxu0 0
      %627 = vmatpush1.bf16.msra.mxu0 0
      %628 = vmatprep.subr.bf16.mxu0 0
      %629 = vmatpush1.bf16.msra.mxu0 0
      %630 = vmatprep.subr.bf16.mxu0 0
      %631 = vmatpush1.bf16.msra.mxu0 0
      %632 = vmatprep.mubr.bf16.mxu0 0
      %633 = vmatmul.mubr.bf16.gmra.mrb[0].mxu0 %v589
      %v634 = vpop.f32.mrb[0].mxu0
      %v635 = vadd.f32 %v560, %v634
      %v636 = vpop.f32.mrb[0].mxu0
      %v637 = vadd.f32 %v564, %v636
      %v638 = vpop.f32.mrb[0].mxu0
      %v639 = vadd.f32 %v560, %v638
      %v640 = vpop.f32.mrb[0].mxu0
      %v641 = vadd.f32 %v564, %v640
      %642 = vmatprep.mubr.bf16.mxu0 0
      %643 = vmatmul.mubr.bf16.gmra.mrb[0].mxu0 %v592
      %v644 = vpop.f32.mrb[0].mxu0
      %v645 = vadd.f32 %v560, %v644
      %v646 = vpop.f32.mrb[0].mxu0
      %v647 = vadd.f32 %v564, %v646
      %v648 = vpop.f32.mrb[0].mxu0
      %v649 = vadd.f32 %v560, %v648
      %v650 = vpop.f32.mrb[0].mxu0
      %v651 = vadd.f32 %v564, %v650
      %652 = vmatprep.mubr.bf16.mxu0 0
      %653 = vmatmul.mubr.bf16.gmra.mrb[0].mxu0 %v595
      %v654 = vpop.f32.mrb[0].mxu0
      %v655 = vadd.f32 %v560, %v654
      %v656 = vpop.f32.mrb[0].mxu0
      %v657 = vadd.f32 %v564, %v656
      %v658 = vpop.f32.mrb[0].mxu0
      %v659 = vadd.f32 %v560, %v658
      %v660 = vpop.f32.mrb[0].mxu0
      %v661 = vadd.f32 %v564, %v660
      %662 = vmatprep.mubr.bf16.mxu0 0
      %663 = vmatmul.mubr.bf16.gmra.mrb[0].mxu0 %v598
      %v664 = vpop.f32.mrb[0].mxu0
      %v665 = vadd.f32 %v560, %v664
      %v666 = vpop.f32.mrb[0].mxu0
      %v667 = vadd.f32 %v564, %v666
      %v668 = vpop.f32.mrb[0].mxu0
      %v669 = vadd.f32 %v560, %v668
      %v670 = vpop.f32.mrb[0].mxu0
      %v671 = vadd.f32 %v564, %v670
      %672 = vdwg.mxu0
      %v673 = vmul.f32 %v635, 0.5
      %v674 = vmul.f32 %v637, 0.5
      %v675 = vmul.f32 %v639, 0.5
      %v676 = vmul.f32 %v641, 0.5
      %v677 = vmul.f32 %v645, 0.5
      %v678 = vmul.f32 %v647, 0.5
      %v679 = vmul.f32 %v649, 0.5
      %v680 = vmul.f32 %v651, 0.5
      %v681 = vmul.f32 %v655, 0.5
      %v682 = vmul.f32 %v657, 0.5
      %v683 = vmul.f32 %v659, 0.5
      %v684 = vmul.f32 %v661, 0.5
      %v685 = vmul.f32 %v665, 0.5
      %v686 = vmul.f32 %v667, 0.5
      %v687 = vmul.f32 %v669, 0.5
      %v688 = vmul.f32 %v671, 0.5
      %v689 = vtanh.pop %v673
      %v690 = vtanh.pop %v674
      %v691 = vtanh.pop %v675
      %v692 = vtanh.pop %v676
      %v693 = vtanh.pop %v677
      %v694 = vtanh.pop %v678
      %v695 = vtanh.pop %v679
      %v696 = vtanh.pop %v680
      %v697 = vtanh.pop %v681
      %v698 = vtanh.pop %v682
      %v699 = vtanh.pop %v683
      %v700 = vtanh.pop %v684
      %v701 = vtanh.pop %v685
      %v702 = vtanh.pop %v686
      %v703 = vtanh.pop %v687
      %v704 = vtanh.pop %v688
      %v705 = vmul.f32 %v689, 0.5
      %v706 = vmul.f32 %v690, 0.5
      %v707 = vmul.f32 %v691, 0.5
      %v708 = vmul.f32 %v692, 0.5
      %v709 = vmul.f32 %v693, 0.5
      %v710 = vmul.f32 %v694, 0.5
      %v711 = vmul.f32 %v695, 0.5
      %v712 = vmul.f32 %v696, 0.5
      %v713 = vmul.f32 %v697, 0.5
      %v714 = vmul.f32 %v698, 0.5
      %v715 = vmul.f32 %v699, 0.5
      %v716 = vmul.f32 %v700, 0.5
      %v717 = vmul.f32 %v701, 0.5
      %v718 = vmul.f32 %v702, 0.5
      %v719 = vmul.f32 %v703, 0.5
      %v720 = vmul.f32 %v704, 0.5
      %v721 = vadd.f32 %v705, 0.5
      %v722 = vadd.f32 %v706, 0.5
      %v723 = vadd.f32 %v707, 0.5
      %v724 = vadd.f32 %v708, 0.5
      %v725 = vadd.f32 %v709, 0.5
      %v726 = vadd.f32 %v710, 0.5
      %v727 = vadd.f32 %v711, 0.5
      %v728 = vadd.f32 %v712, 0.5
      %v729 = vadd.f32 %v713, 0.5
      %v730 = vadd.f32 %v714, 0.5
      %v731 = vadd.f32 %v715, 0.5
      %v732 = vadd.f32 %v716, 0.5
      %v733 = vadd.f32 %v717, 0.5
      %v734 = vadd.f32 %v718, 0.5
      %v735 = vadd.f32 %v719, 0.5
      %v736 = vadd.f32 %v720, 0.5
      %v737 = vmul.f32 %v635, %v721
      %v738 = vmul.f32 %v637, %v722
      %v739 = vmul.f32 %v639, %v723
      %v740 = vmul.f32 %v641, %v724
      %v741 = vmul.f32 %v645, %v725
      %v742 = vmul.f32 %v647, %v726
      %v743 = vmul.f32 %v649, %v727
      %v744 = vmul.f32 %v651, %v728
      %v745 = vmul.f32 %v655, %v729
      %v746 = vmul.f32 %v657, %v730
      %v747 = vmul.f32 %v659, %v731
      %v748 = vmul.f32 %v661, %v732
      %v749 = vmul.f32 %v665, %v733
      %v750 = vmul.f32 %v667, %v734
      %v751 = vmul.f32 %v669, %v735
      %v752 = vmul.f32 %v671, %v736
      %v753 = vld [vmem:[#allocation2] sm:$0x3]
      %v754 = vadd.f32 %v737, %v739
      %v755 = vadd.f32 %v754, %v741
      %v756 = vadd.f32 %v755, %v743
      %v757 = vadd.f32 %v756, %v745
      %v758 = vadd.f32 %v757, %v747
      %v759 = vadd.f32 %v758, %v749
      %v760 = vadd.f32 %v759, %v751
      %v761 = vrot.slane %v760, 4
      %v762 = vadd.f32 %v760, %v761
      %v763 = vrot.slane %v762, 2
      %v764 = vadd.f32 %v762, %v763
      %v765 = vrot.slane %v764, 1
      %v766 = vadd.f32 %v764, %v765
      %v767 = vadd.f32 %v738, %v740
      %v768 = vadd.f32 %v767, %v742
      %v769 = vadd.f32 %v768, %v744
      %v770 = vadd.f32 %v769, %v746
      %v771 = vadd.f32 %v770, %v748
      %v772 = vadd.f32 %v771, %v750
      %v773 = vadd.f32 %v772, %v752
      %v774 = vrot.slane %v773, 4
      %v775 = vadd.f32 %v773, %v774
      %v776 = vrot.slane %v775, 2
      %v777 = vadd.f32 %v775, %v776
      %v778 = vrot.slane %v777, 1
      %v779 = vadd.f32 %v777, %v778
      %v782 = vcombine.low %v766, %v779
      %v784 = vunpack.c.l.s4 1966171168
      %v785 = vunpack.c.0.s8 %v784
      %v786 = vlaneseq
      %v787 = vshrl.u32 %v786, 7
      %v788 = vsub.s32 %v785, %v787
      %v789 = vrot.slane %v782, %v788
      %v791 = vunpack.c.l.s4 1966171168
      %v792 = vunpack.c.0.s8 %v791
      %v793 = vlaneseq
      %v794 = vshrl.u32 %v793, 7
      %v795 = vsub.s32 %v792, %v794
      %v796 = vrot.slane %v789, %v795
      %v798 = vadd.f32 %v753, %v796
      %v799 = vlaneseq
      %vm800 = vcmp.ge.s32.totalorder %v799, 0
      %vm801 = vcmp.lt.s32.totalorder %v799, 256
      %vm802 = vmand %vm800, %vm801
      %803 = vst.msk [vmem:[#allocation2] sm:$0x3] %vm802, %v798
      %v804 = vld [vmem:[%s335 + $0x8] sm:$0xff]
      %v805 = vld [vmem:[%s335 + $0x30] sm:$0xff]
      %v806 = vld [vmem:[%s335 + $0x58] sm:$0xff]
      %v807 = vld [vmem:[%s335 + $0x80] sm:$0xff]
      %v808 = vld [vmem:[%s339 + $0x2] sm:$0x3]
      %v810 = vlaneseq
      %v811 = vshrl.u32 %v810, 7
      %v812 = vsub.s32 0, %v811
      %v813 = vrot.slane %v808, %v812
      %v814 = vlaneseq
      %v815 = vshrl.u32 %v814, 7
      %v816 = vsub.s32 1, %v815
      %v817 = vrot.slane %v808, %v816
      %v824 = vunpack.c.l.b16 %v804
      %v825 = vunpack.c.h.b16 %v804
      %v826 = vunpack.c.l.b16 %v805
      %v827 = vunpack.c.h.b16 %v805
      %v828 = vunpack.c.l.b16 %v806
      %v829 = vunpack.c.h.b16 %v806
      %v830 = vunpack.c.l.b16 %v807
      %v831 = vunpack.c.h.b16 %v807
      %v832 = vpack.c.b16 %v826, %v824
      %v833 = vpack.c.b16 %v827, %v825
      %v834 = vpack.c.b16 %v830, %v828
      %v835 = vpack.c.b16 %v831, %v829
      %840 = vmatprep.subr.bf16.mxu0 %v833
      %841 = vmatpush1.bf16.msra.mxu0 %v832
      %842 = vmatprep.subr.bf16.mxu0 %v835
      %843 = vmatpush1.bf16.msra.mxu0 %v834
      %844 = vmatprep.subr.bf16.mxu0 0
      %845 = vmatpush1.bf16.msra.mxu0 0
      %846 = vmatprep.subr.bf16.mxu0 0
      %847 = vmatpush1.bf16.msra.mxu0 0
      %848 = vmatprep.subr.bf16.mxu0 0
      %849 = vmatpush1.bf16.msra.mxu0 0
      %850 = vmatprep.subr.bf16.mxu0 0
      %851 = vmatpush1.bf16.msra.mxu0 0
      %852 = vmatprep.subr.bf16.mxu0 0
      %853 = vmatpush1.bf16.msra.mxu0 0
      %854 = vmatprep.subr.bf16.mxu0 0
      %855 = vmatpush1.bf16.msra.mxu0 0
      %856 = vmatprep.subr.bf16.mxu0 0
      %857 = vmatpush1.bf16.msra.mxu0 0
      %858 = vmatprep.subr.bf16.mxu0 0
      %859 = vmatpush1.bf16.msra.mxu0 0
      %860 = vmatprep.subr.bf16.mxu0 0
      %861 = vmatpush1.bf16.msra.mxu0 0
      %862 = vmatprep.subr.bf16.mxu0 0
      %863 = vmatpush1.bf16.msra.mxu0 0
      %864 = vmatprep.subr.bf16.mxu0 0
      %865 = vmatpush1.bf16.msra.mxu0 0
      %866 = vmatprep.subr.bf16.mxu0 0
      %867 = vmatpush1.bf16.msra.mxu0 0
      %868 = vmatprep.subr.bf16.mxu0 0
      %869 = vmatpush1.bf16.msra.mxu0 0
      %870 = vmatprep.subr.bf16.mxu0 0
      %871 = vmatpush1.bf16.msra.mxu0 0
      %872 = vmatprep.mubr.bf16.mxu0 0
      %873 = vmatmul.mubr.bf16.gmra.mrb[0].mxu0 %v589
      %v874 = vpop.f32.mrb[0].mxu0
      %v875 = vadd.f32 %v813, %v874
      %v876 = vpop.f32.mrb[0].mxu0
      %v877 = vadd.f32 %v817, %v876
      %v878 = vpop.f32.mrb[0].mxu0
      %v879 = vadd.f32 %v813, %v878
      %v880 = vpop.f32.mrb[0].mxu0
      %v881 = vadd.f32 %v817, %v880
      %882 = vmatprep.mubr.bf16.mxu0 0
      %883 = vmatmul.mubr.bf16.gmra.mrb[0].mxu0 %v592
      %v884 = vpop.f32.mrb[0].mxu0
      %v885 = vadd.f32 %v813, %v884
      %v886 = vpop.f32.mrb[0].mxu0
      %v887 = vadd.f32 %v817, %v886
      %v888 = vpop.f32.mrb[0].mxu0
      %v889 = vadd.f32 %v813, %v888
      %v890 = vpop.f32.mrb[0].mxu0
      %v891 = vadd.f32 %v817, %v890
      %892 = vmatprep.mubr.bf16.mxu0 0
      %893 = vmatmul.mubr.bf16.gmra.mrb[0].mxu0 %v595
      %v894 = vpop.f32.mrb[0].mxu0
      %v895 = vadd.f32 %v813, %v894
      %v896 = vpop.f32.mrb[0].mxu0
      %v897 = vadd.f32 %v817, %v896
      %v898 = vpop.f32.mrb[0].mxu0
      %v899 = vadd.f32 %v813, %v898
      %v900 = vpop.f32.mrb[0].mxu0
      %v901 = vadd.f32 %v817, %v900
      %902 = vmatprep.mubr.bf16.mxu0 0
      %903 = vmatmul.mubr.bf16.gmra.mrb[0].mxu0 %v598
      %v904 = vpop.f32.mrb[0].mxu0
      %v905 = vadd.f32 %v813, %v904
      %v906 = vpop.f32.mrb[0].mxu0
      %v907 = vadd.f32 %v817, %v906
      %v908 = vpop.f32.mrb[0].mxu0
      %v909 = vadd.f32 %v813, %v908
      %v910 = vpop.f32.mrb[0].mxu0
      %v911 = vadd.f32 %v817, %v910
      %912 = vdwg.mxu0
      %v913 = vmul.f32 %v875, 0.5
      %v914 = vmul.f32 %v877, 0.5
      %v915 = vmul.f32 %v879, 0.5
      %v916 = vmul.f32 %v881, 0.5
      %v917 = vmul.f32 %v885, 0.5
      %v918 = vmul.f32 %v887, 0.5
      %v919 = vmul.f32 %v889, 0.5
      %v920 = vmul.f32 %v891, 0.5
      %v921 = vmul.f32 %v895, 0.5
      %v922 = vmul.f32 %v897, 0.5
      %v923 = vmul.f32 %v899, 0.5
      %v924 = vmul.f32 %v901, 0.5
      %v925 = vmul.f32 %v905, 0.5
      %v926 = vmul.f32 %v907, 0.5
      %v927 = vmul.f32 %v909, 0.5
      %v928 = vmul.f32 %v911, 0.5
      %v929 = vtanh.pop %v913
      %v930 = vtanh.pop %v914
      %v931 = vtanh.pop %v915
      %v932 = vtanh.pop %v916
      %v933 = vtanh.pop %v917
      %v934 = vtanh.pop %v918
      %v935 = vtanh.pop %v919
      %v936 = vtanh.pop %v920
      %v937 = vtanh.pop %v921
      %v938 = vtanh.pop %v922
      %v939 = vtanh.pop %v923
      %v940 = vtanh.pop %v924
      %v941 = vtanh.pop %v925
      %v942 = vtanh.pop %v926
      %v943 = vtanh.pop %v927
      %v944 = vtanh.pop %v928
      %v945 = vmul.f32 %v929, 0.5
      %v946 = vmul.f32 %v930, 0.5
      %v947 = vmul.f32 %v931, 0.5
      %v948 = vmul.f32 %v932, 0.5
      %v949 = vmul.f32 %v933, 0.5
      %v950 = vmul.f32 %v934, 0.5
      %v951 = vmul.f32 %v935, 0.5
      %v952 = vmul.f32 %v936, 0.5
      %v953 = vmul.f32 %v937, 0.5
      %v954 = vmul.f32 %v938, 0.5
      %v955 = vmul.f32 %v939, 0.5
      %v956 = vmul.f32 %v940, 0.5
      %v957 = vmul.f32 %v941, 0.5
      %v958 = vmul.f32 %v942, 0.5
      %v959 = vmul.f32 %v943, 0.5
      %v960 = vmul.f32 %v944, 0.5
      %v961 = vadd.f32 %v945, 0.5
      %v962 = vadd.f32 %v946, 0.5
      %v963 = vadd.f32 %v947, 0.5
      %v964 = vadd.f32 %v948, 0.5
      %v965 = vadd.f32 %v949, 0.5
      %v966 = vadd.f32 %v950, 0.5
      %v967 = vadd.f32 %v951, 0.5
      %v968 = vadd.f32 %v952, 0.5
      %v969 = vadd.f32 %v953, 0.5
      %v970 = vadd.f32 %v954, 0.5
      %v971 = vadd.f32 %v955, 0.5
      %v972 = vadd.f32 %v956, 0.5
      %v973 = vadd.f32 %v957, 0.5
      %v974 = vadd.f32 %v958, 0.5
      %v975 = vadd.f32 %v959, 0.5
      %v976 = vadd.f32 %v960, 0.5
      %v977 = vmul.f32 %v875, %v961
      %v978 = vmul.f32 %v877, %v962
      %v979 = vmul.f32 %v879, %v963
      %v980 = vmul.f32 %v881, %v964
      %v981 = vmul.f32 %v885, %v965
      %v982 = vmul.f32 %v887, %v966
      %v983 = vmul.f32 %v889, %v967
      %v984 = vmul.f32 %v891, %v968
      %v985 = vmul.f32 %v895, %v969
      %v986 = vmul.f32 %v897, %v970
      %v987 = vmul.f32 %v899, %v971
      %v988 = vmul.f32 %v901, %v972
      %v989 = vmul.f32 %v905, %v973
      %v990 = vmul.f32 %v907, %v974
      %v991 = vmul.f32 %v909, %v975
      %v992 = vmul.f32 %v911, %v976
      %v993 = vld [vmem:[#allocation2 + $0x2] sm:$0x3]
      %v994 = vadd.f32 %v977, %v979
      %v995 = vadd.f32 %v994, %v981
      %v996 = vadd.f32 %v995, %v983
      %v997 = vadd.f32 %v996, %v985
      %v998 = vadd.f32 %v997, %v987
      %v999 = vadd.f32 %v998, %v989
      %v1000 = vadd.f32 %v999, %v991
      %v1001 = vrot.slane %v1000, 4
      %v1002 = vadd.f32 %v1000, %v1001
      %v1003 = vrot.slane %v1002, 2
      %v1004 = vadd.f32 %v1002, %v1003
      %v1005 = vrot.slane %v1004, 1
      %v1006 = vadd.f32 %v1004, %v1005
      %v1007 = vadd.f32 %v978, %v980
      %v1008 = vadd.f32 %v1007, %v982
      %v1009 = vadd.f32 %v1008, %v984
      %v1010 = vadd.f32 %v1009, %v986
      %v1011 = vadd.f32 %v1010, %v988
      %v1012 = vadd.f32 %v1011, %v990
      %v1013 = vadd.f32 %v1012, %v992
      %v1014 = vrot.slane %v1013, 4
      %v1015 = vadd.f32 %v1013, %v1014
      %v1016 = vrot.slane %v1015, 2
      %v1017 = vadd.f32 %v1015, %v1016
      %v1018 = vrot.slane %v1017, 1
      %v1019 = vadd.f32 %v1017, %v1018
      %v1022 = vcombine.low %v1006, %v1019
      %v1024 = vunpack.c.l.s4 1966171168
      %v1025 = vunpack.c.0.s8 %v1024
      %v1026 = vlaneseq
      %v1027 = vshrl.u32 %v1026, 7
      %v1028 = vsub.s32 %v1025, %v1027
      %v1029 = vrot.slane %v1022, %v1028
      %v1031 = vunpack.c.l.s4 1966171168
      %v1032 = vunpack.c.0.s8 %v1031
      %v1033 = vlaneseq
      %v1034 = vshrl.u32 %v1033, 7
      %v1035 = vsub.s32 %v1032, %v1034
      %v1036 = vrot.slane %v1029, %v1035
      %v1038 = vadd.f32 %v993, %v1036
      %1039 = vst.msk [vmem:[#allocation2 + $0x2] sm:$0x3] %vm802, %v1038
      %v1040 = vld [vmem:[%s335 + $0x10] sm:$0xff]
      %v1041 = vld [vmem:[%s335 + $0x38] sm:$0xff]
      %v1042 = vld [vmem:[%s335 + $0x60] sm:$0xff]
      %v1043 = vld [vmem:[%s335 + $0x88] sm:$0xff]
      %v1044 = vld [vmem:[%s339 + $0x4] sm:$0x3]
      %v1046 = vlaneseq
      %v1047 = vshrl.u32 %v1046, 7
      %v1048 = vsub.s32 0, %v1047
      %v1049 = vrot.slane %v1044, %v1048
      %v1050 = vlaneseq
      %v1051 = vshrl.u32 %v1050, 7
      %v1052 = vsub.s32 1, %v1051
      %v1053 = vrot.slane %v1044, %v1052
      %v1060 = vunpack.c.l.b16 %v1040
      %v1061 = vunpack.c.h.b16 %v1040
      %v1062 = vunpack.c.l.b16 %v1041
      %v1063 = vunpack.c.h.b16 %v1041
      %v1064 = vunpack.c.l.b16 %v1042
      %v1065 = vunpack.c.h.b16 %v1042
      %v1066 = vunpack.c.l.b16 %v1043
      %v1067 = vunpack.c.h.b16 %v1043
      %v1068 = vpack.c.b16 %v1062, %v1060
      %v1069 = vpack.c.b16 %v1063, %v1061
      %v1070 = vpack.c.b16 %v1066, %v1064
      %v1071 = vpack.c.b16 %v1067, %v1065
      %1076 = vmatprep.subr.bf16.mxu0 %v1069
      %1077 = vmatpush1.bf16.msra.mxu0 %v1068
      %1078 = vmatprep.subr.bf16.mxu0 %v1071
      %1079 = vmatpush1.bf16.msra.mxu0 %v1070
      %1080 = vmatprep.subr.bf16.mxu0 0
      %1081 = vmatpush1.bf16.msra.mxu0 0
      %1082 = vmatprep.subr.bf16.mxu0 0
      %1083 = vmatpush1.bf16.msra.mxu0 0
      %1084 = vmatprep.subr.bf16.mxu0 0
      %1085 = vmatpush1.bf16.msra.mxu0 0
      %1086 = vmatprep.subr.bf16.mxu0 0
      %1087 = vmatpush1.bf16.msra.mxu0 0
      %1088 = vmatprep.subr.bf16.mxu0 0
      %1089 = vmatpush1.bf16.msra.mxu0 0
      %1090 = vmatprep.subr.bf16.mxu0 0
      %1091 = vmatpush1.bf16.msra.mxu0 0
      %1092 = vmatprep.subr.bf16.mxu0 0
      %1093 = vmatpush1.bf16.msra.mxu0 0
      %1094 = vmatprep.subr.bf16.mxu0 0
      %1095 = vmatpush1.bf16.msra.mxu0 0
      %1096 = vmatprep.subr.bf16.mxu0 0
      %1097 = vmatpush1.bf16.msra.mxu0 0
      %1098 = vmatprep.subr.bf16.mxu0 0
      %1099 = vmatpush1.bf16.msra.mxu0 0
      %1100 = vmatprep.subr.bf16.mxu0 0
      %1101 = vmatpush1.bf16.msra.mxu0 0
      %1102 = vmatprep.subr.bf16.mxu0 0
      %1103 = vmatpush1.bf16.msra.mxu0 0
      %1104 = vmatprep.subr.bf16.mxu0 0
      %1105 = vmatpush1.bf16.msra.mxu0 0
      %1106 = vmatprep.subr.bf16.mxu0 0
      %1107 = vmatpush1.bf16.msra.mxu0 0
      %1108 = vmatprep.mubr.bf16.mxu0 0
      %1109 = vmatmul.mubr.bf16.gmra.mrb[0].mxu0 %v589
      %v1110 = vpop.f32.mrb[0].mxu0
      %v1111 = vadd.f32 %v1049, %v1110
      %v1112 = vpop.f32.mrb[0].mxu0
      %v1113 = vadd.f32 %v1053, %v1112
      %v1114 = vpop.f32.mrb[0].mxu0
      %v1115 = vadd.f32 %v1049, %v1114
      %v1116 = vpop.f32.mrb[0].mxu0
      %v1117 = vadd.f32 %v1053, %v1116
      %1118 = vmatprep.mubr.bf16.mxu0 0
      %1119 = vmatmul.mubr.bf16.gmra.mrb[0].mxu0 %v592
      %v1120 = vpop.f32.mrb[0].mxu0
      %v1121 = vadd.f32 %v1049, %v1120
      %v1122 = vpop.f32.mrb[0].mxu0
      %v1123 = vadd.f32 %v1053, %v1122
      %v1124 = vpop.f32.mrb[0].mxu0
      %v1125 = vadd.f32 %v1049, %v1124
      %v1126 = vpop.f32.mrb[0].mxu0
      %v1127 = vadd.f32 %v1053, %v1126
      %1128 = vmatprep.mubr.bf16.mxu0 0
      %1129 = vmatmul.mubr.bf16.gmra.mrb[0].mxu0 %v595
      %v1130 = vpop.f32.mrb[0].mxu0
      %v1131 = vadd.f32 %v1049, %v1130
      %v1132 = vpop.f32.mrb[0].mxu0
      %v1133 = vadd.f32 %v1053, %v1132
      %v1134 = vpop.f32.mrb[0].mxu0
      %v1135 = vadd.f32 %v1049, %v1134
      %v1136 = vpop.f32.mrb[0].mxu0
      %v1137 = vadd.f32 %v1053, %v1136
      %1138 = vmatprep.mubr.bf16.mxu0 0
      %1139 = vmatmul.mubr.bf16.gmra.mrb[0].mxu0 %v598
      %v1140 = vpop.f32.mrb[0].mxu0
      %v1141 = vadd.f32 %v1049, %v1140
      %v1142 = vpop.f32.mrb[0].mxu0
      %v1143 = vadd.f32 %v1053, %v1142
      %v1144 = vpop.f32.mrb[0].mxu0
      %v1145 = vadd.f32 %v1049, %v1144
      %v1146 = vpop.f32.mrb[0].mxu0
      %v1147 = vadd.f32 %v1053, %v1146
      %1148 = vdwg.mxu0
      %v1149 = vmul.f32 %v1111, 0.5
      %v1150 = vmul.f32 %v1113, 0.5
      %v1151 = vmul.f32 %v1115, 0.5
      %v1152 = vmul.f32 %v1117, 0.5
      %v1153 = vmul.f32 %v1121, 0.5
      %v1154 = vmul.f32 %v1123, 0.5
      %v1155 = vmul.f32 %v1125, 0.5
      %v1156 = vmul.f32 %v1127, 0.5
      %v1157 = vmul.f32 %v1131, 0.5
      %v1158 = vmul.f32 %v1133, 0.5
      %v1159 = vmul.f32 %v1135, 0.5
      %v1160 = vmul.f32 %v1137, 0.5
      %v1161 = vmul.f32 %v1141, 0.5
      %v1162 = vmul.f32 %v1143, 0.5
      %v1163 = vmul.f32 %v1145, 0.5
      %v1164 = vmul.f32 %v1147, 0.5
      %v1165 = vtanh.pop %v1149
      %v1166 = vtanh.pop %v1150
      %v1167 = vtanh.pop %v1151
      %v1168 = vtanh.pop %v1152
      %v1169 = vtanh.pop %v1153
      %v1170 = vtanh.pop %v1154
      %v1171 = vtanh.pop %v1155
      %v1172 = vtanh.pop %v1156
      %v1173 = vtanh.pop %v1157
      %v1174 = vtanh.pop %v1158
      %v1175 = vtanh.pop %v1159
      %v1176 = vtanh.pop %v1160
      %v1177 = vtanh.pop %v1161
      %v1178 = vtanh.pop %v1162
      %v1179 = vtanh.pop %v1163
      %v1180 = vtanh.pop %v1164
      %v1181 = vmul.f32 %v1165, 0.5
      %v1182 = vmul.f32 %v1166, 0.5
      %v1183 = vmul.f32 %v1167, 0.5
      %v1184 = vmul.f32 %v1168, 0.5
      %v1185 = vmul.f32 %v1169, 0.5
      %v1186 = vmul.f32 %v1170, 0.5
      %v1187 = vmul.f32 %v1171, 0.5
      %v1188 = vmul.f32 %v1172, 0.5
      %v1189 = vmul.f32 %v1173, 0.5
      %v1190 = vmul.f32 %v1174, 0.5
      %v1191 = vmul.f32 %v1175, 0.5
      %v1192 = vmul.f32 %v1176, 0.5
      %v1193 = vmul.f32 %v1177, 0.5
      %v1194 = vmul.f32 %v1178, 0.5
      %v1195 = vmul.f32 %v1179, 0.5
      %v1196 = vmul.f32 %v1180, 0.5
      %v1197 = vadd.f32 %v1181, 0.5
      %v1198 = vadd.f32 %v1182, 0.5
      %v1199 = vadd.f32 %v1183, 0.5
      %v1200 = vadd.f32 %v1184, 0.5
      %v1201 = vadd.f32 %v1185, 0.5
      %v1202 = vadd.f32 %v1186, 0.5
      %v1203 = vadd.f32 %v1187, 0.5
      %v1204 = vadd.f32 %v1188, 0.5
      %v1205 = vadd.f32 %v1189, 0.5
      %v1206 = vadd.f32 %v1190, 0.5
      %v1207 = vadd.f32 %v1191, 0.5
      %v1208 = vadd.f32 %v1192, 0.5
      %v1209 = vadd.f32 %v1193, 0.5
      %v1210 = vadd.f32 %v1194, 0.5
      %v1211 = vadd.f32 %v1195, 0.5
      %v1212 = vadd.f32 %v1196, 0.5
      %v1213 = vmul.f32 %v1111, %v1197
      %v1214 = vmul.f32 %v1113, %v1198
      %v1215 = vmul.f32 %v1115, %v1199
      %v1216 = vmul.f32 %v1117, %v1200
      %v1217 = vmul.f32 %v1121, %v1201
      %v1218 = vmul.f32 %v1123, %v1202
      %v1219 = vmul.f32 %v1125, %v1203
      %v1220 = vmul.f32 %v1127, %v1204
      %v1221 = vmul.f32 %v1131, %v1205
      %v1222 = vmul.f32 %v1133, %v1206
      %v1223 = vmul.f32 %v1135, %v1207
      %v1224 = vmul.f32 %v1137, %v1208
      %v1225 = vmul.f32 %v1141, %v1209
      %v1226 = vmul.f32 %v1143, %v1210
      %v1227 = vmul.f32 %v1145, %v1211
      %v1228 = vmul.f32 %v1147, %v1212
      %v1229 = vld [vmem:[#allocation2 + $0x4] sm:$0x3]
      %v1230 = vadd.f32 %v1213, %v1215
      %v1231 = vadd.f32 %v1230, %v1217
      %v1232 = vadd.f32 %v1231, %v1219
      %v1233 = vadd.f32 %v1232, %v1221
      %v1234 = vadd.f32 %v1233, %v1223
      %v1235 = vadd.f32 %v1234, %v1225
      %v1236 = vadd.f32 %v1235, %v1227
      %v1237 = vrot.slane %v1236, 4
      %v1238 = vadd.f32 %v1236, %v1237
      %v1239 = vrot.slane %v1238, 2
      %v1240 = vadd.f32 %v1238, %v1239
      %v1241 = vrot.slane %v1240, 1
      %v1242 = vadd.f32 %v1240, %v1241
      %v1243 = vadd.f32 %v1214, %v1216
      %v1244 = vadd.f32 %v1243, %v1218
      %v1245 = vadd.f32 %v1244, %v1220
      %v1246 = vadd.f32 %v1245, %v1222
      %v1247 = vadd.f32 %v1246, %v1224
      %v1248 = vadd.f32 %v1247, %v1226
      %v1249 = vadd.f32 %v1248, %v1228
      %v1250 = vrot.slane %v1249, 4
      %v1251 = vadd.f32 %v1249, %v1250
      %v1252 = vrot.slane %v1251, 2
      %v1253 = vadd.f32 %v1251, %v1252
      %v1254 = vrot.slane %v1253, 1
      %v1255 = vadd.f32 %v1253, %v1254
      %v1258 = vcombine.low %v1242, %v1255
      %v1260 = vunpack.c.l.s4 1966171168
      %v1261 = vunpack.c.0.s8 %v1260
      %v1262 = vlaneseq
      %v1263 = vshrl.u32 %v1262, 7
      %v1264 = vsub.s32 %v1261, %v1263
      %v1265 = vrot.slane %v1258, %v1264
      %v1267 = vunpack.c.l.s4 1966171168
      %v1268 = vunpack.c.0.s8 %v1267
      %v1269 = vlaneseq
      %v1270 = vshrl.u32 %v1269, 7
      %v1271 = vsub.s32 %v1268, %v1270
      %v1272 = vrot.slane %v1265, %v1271
      %v1274 = vadd.f32 %v1229, %v1272
      %1275 = vst.msk [vmem:[#allocation2 + $0x4] sm:$0x3] %vm802, %v1274
      %v1276 = vld [vmem:[%s335 + $0x18] sm:$0xff]
      %v1277 = vld [vmem:[%s335 + $0x40] sm:$0xff]
      %v1278 = vld [vmem:[%s335 + $0x68] sm:$0xff]
      %v1279 = vld [vmem:[%s335 + $0x90] sm:$0xff]
      %v1280 = vld [vmem:[%s339 + $0x6] sm:$0x3]
      %v1282 = vlaneseq
      %v1283 = vshrl.u32 %v1282, 7
      %v1284 = vsub.s32 0, %v1283
      %v1285 = vrot.slane %v1280, %v1284
      %v1286 = vlaneseq
      %v1287 = vshrl.u32 %v1286, 7
      %v1288 = vsub.s32 1, %v1287
      %v1289 = vrot.slane %v1280, %v1288
      %v1296 = vunpack.c.l.b16 %v1276
      %v1297 = vunpack.c.h.b16 %v1276
      %v1298 = vunpack.c.l.b16 %v1277
      %v1299 = vunpack.c.h.b16 %v1277
      %v1300 = vunpack.c.l.b16 %v1278
      %v1301 = vunpack.c.h.b16 %v1278
      %v1302 = vunpack.c.l.b16 %v1279
      %v1303 = vunpack.c.h.b16 %v1279
      %v1304 = vpack.c.b16 %v1298, %v1296
      %v1305 = vpack.c.b16 %v1299, %v1297
      %v1306 = vpack.c.b16 %v1302, %v1300
      %v1307 = vpack.c.b16 %v1303, %v1301
      %1312 = vmatprep.subr.bf16.mxu0 %v1305
      %1313 = vmatpush1.bf16.msra.mxu0 %v1304
      %1314 = vmatprep.subr.bf16.mxu0 %v1307
      %1315 = vmatpush1.bf16.msra.mxu0 %v1306
      %1316 = vmatprep.subr.bf16.mxu0 0
      %1317 = vmatpush1.bf16.msra.mxu0 0
      %1318 = vmatprep.subr.bf16.mxu0 0
      %1319 = vmatpush1.bf16.msra.mxu0 0
      %1320 = vmatprep.subr.bf16.mxu0 0
      %1321 = vmatpush1.bf16.msra.mxu0 0
      %1322 = vmatprep.subr.bf16.mxu0 0
      %1323 = vmatpush1.bf16.msra.mxu0 0
      %1324 = vmatprep.subr.bf16.mxu0 0
      %1325 = vmatpush1.bf16.msra.mxu0 0
      %1326 = vmatprep.subr.bf16.mxu0 0
      %1327 = vmatpush1.bf16.msra.mxu0 0
      %1328 = vmatprep.subr.bf16.mxu0 0
      %1329 = vmatpush1.bf16.msra.mxu0 0
      %1330 = vmatprep.subr.bf16.mxu0 0
      %1331 = vmatpush1.bf16.msra.mxu0 0
      %1332 = vmatprep.subr.bf16.mxu0 0
      %1333 = vmatpush1.bf16.msra.mxu0 0
      %1334 = vmatprep.subr.bf16.mxu0 0
      %1335 = vmatpush1.bf16.msra.mxu0 0
      %1336 = vmatprep.subr.bf16.mxu0 0
      %1337 = vmatpush1.bf16.msra.mxu0 0
      %1338 = vmatprep.subr.bf16.mxu0 0
      %1339 = vmatpush1.bf16.msra.mxu0 0
      %1340 = vmatprep.subr.bf16.mxu0 0
      %1341 = vmatpush1.bf16.msra.mxu0 0
      %1342 = vmatprep.subr.bf16.mxu0 0
      %1343 = vmatpush1.bf16.msra.mxu0 0
      %1344 = vmatprep.mubr.bf16.mxu0 0
      %1345 = vmatmul.mubr.bf16.gmra.mrb[0].mxu0 %v589
      %v1346 = vpop.f32.mrb[0].mxu0
      %v1347 = vadd.f32 %v1285, %v1346
      %v1348 = vpop.f32.mrb[0].mxu0
      %v1349 = vadd.f32 %v1289, %v1348
      %v1350 = vpop.f32.mrb[0].mxu0
      %v1351 = vadd.f32 %v1285, %v1350
      %v1352 = vpop.f32.mrb[0].mxu0
      %v1353 = vadd.f32 %v1289, %v1352
      %1354 = vmatprep.mubr.bf16.mxu0 0
      %1355 = vmatmul.mubr.bf16.gmra.mrb[0].mxu0 %v592
      %v1356 = vpop.f32.mrb[0].mxu0
      %v1357 = vadd.f32 %v1285, %v1356
      %v1358 = vpop.f32.mrb[0].mxu0
      %v1359 = vadd.f32 %v1289, %v1358
      %v1360 = vpop.f32.mrb[0].mxu0
      %v1361 = vadd.f32 %v1285, %v1360
      %v1362 = vpop.f32.mrb[0].mxu0
      %v1363 = vadd.f32 %v1289, %v1362
      %1364 = vmatprep.mubr.bf16.mxu0 0
      %1365 = vmatmul.mubr.bf16.gmra.mrb[0].mxu0 %v595
      %v1366 = vpop.f32.mrb[0].mxu0
      %v1367 = vadd.f32 %v1285, %v1366
      %v1368 = vpop.f32.mrb[0].mxu0
      %v1369 = vadd.f32 %v1289, %v1368
      %v1370 = vpop.f32.mrb[0].mxu0
      %v1371 = vadd.f32 %v1285, %v1370
      %v1372 = vpop.f32.mrb[0].mxu0
      %v1373 = vadd.f32 %v1289, %v1372
      %1374 = vmatprep.mubr.bf16.mxu0 0
      %1375 = vmatmul.mubr.bf16.gmra.mrb[0].mxu0 %v598
      %v1376 = vpop.f32.mrb[0].mxu0
      %v1377 = vadd.f32 %v1285, %v1376
      %v1378 = vpop.f32.mrb[0].mxu0
      %v1379 = vadd.f32 %v1289, %v1378
      %v1380 = vpop.f32.mrb[0].mxu0
      %v1381 = vadd.f32 %v1285, %v1380
      %v1382 = vpop.f32.mrb[0].mxu0
      %v1383 = vadd.f32 %v1289, %v1382
      %1384 = vdwg.mxu0
      %v1385 = vmul.f32 %v1347, 0.5
      %v1386 = vmul.f32 %v1349, 0.5
      %v1387 = vmul.f32 %v1351, 0.5
      %v1388 = vmul.f32 %v1353, 0.5
      %v1389 = vmul.f32 %v1357, 0.5
      %v1390 = vmul.f32 %v1359, 0.5
      %v1391 = vmul.f32 %v1361, 0.5
      %v1392 = vmul.f32 %v1363, 0.5
      %v1393 = vmul.f32 %v1367, 0.5
      %v1394 = vmul.f32 %v1369, 0.5
      %v1395 = vmul.f32 %v1371, 0.5
      %v1396 = vmul.f32 %v1373, 0.5
      %v1397 = vmul.f32 %v1377, 0.5
      %v1398 = vmul.f32 %v1379, 0.5
      %v1399 = vmul.f32 %v1381, 0.5
      %v1400 = vmul.f32 %v1383, 0.5
      %v1401 = vtanh.pop %v1385
      %v1402 = vtanh.pop %v1386
      %v1403 = vtanh.pop %v1387
      %v1404 = vtanh.pop %v1388
      %v1405 = vtanh.pop %v1389
      %v1406 = vtanh.pop %v1390
      %v1407 = vtanh.pop %v1391
      %v1408 = vtanh.pop %v1392
      %v1409 = vtanh.pop %v1393
      %v1410 = vtanh.pop %v1394
      %v1411 = vtanh.pop %v1395
      %v1412 = vtanh.pop %v1396
      %v1413 = vtanh.pop %v1397
      %v1414 = vtanh.pop %v1398
      %v1415 = vtanh.pop %v1399
      %v1416 = vtanh.pop %v1400
      %v1417 = vmul.f32 %v1401, 0.5
      %v1418 = vmul.f32 %v1402, 0.5
      %v1419 = vmul.f32 %v1403, 0.5
      %v1420 = vmul.f32 %v1404, 0.5
      %v1421 = vmul.f32 %v1405, 0.5
      %v1422 = vmul.f32 %v1406, 0.5
      %v1423 = vmul.f32 %v1407, 0.5
      %v1424 = vmul.f32 %v1408, 0.5
      %v1425 = vmul.f32 %v1409, 0.5
      %v1426 = vmul.f32 %v1410, 0.5
      %v1427 = vmul.f32 %v1411, 0.5
      %v1428 = vmul.f32 %v1412, 0.5
      %v1429 = vmul.f32 %v1413, 0.5
      %v1430 = vmul.f32 %v1414, 0.5
      %v1431 = vmul.f32 %v1415, 0.5
      %v1432 = vmul.f32 %v1416, 0.5
      %v1433 = vadd.f32 %v1417, 0.5
      %v1434 = vadd.f32 %v1418, 0.5
      %v1435 = vadd.f32 %v1419, 0.5
      %v1436 = vadd.f32 %v1420, 0.5
      %v1437 = vadd.f32 %v1421, 0.5
      %v1438 = vadd.f32 %v1422, 0.5
      %v1439 = vadd.f32 %v1423, 0.5
      %v1440 = vadd.f32 %v1424, 0.5
      %v1441 = vadd.f32 %v1425, 0.5
      %v1442 = vadd.f32 %v1426, 0.5
      %v1443 = vadd.f32 %v1427, 0.5
      %v1444 = vadd.f32 %v1428, 0.5
      %v1445 = vadd.f32 %v1429, 0.5
      %v1446 = vadd.f32 %v1430, 0.5
      %v1447 = vadd.f32 %v1431, 0.5
      %v1448 = vadd.f32 %v1432, 0.5
      %v1449 = vmul.f32 %v1347, %v1433
      %v1450 = vmul.f32 %v1349, %v1434
      %v1451 = vmul.f32 %v1351, %v1435
      %v1452 = vmul.f32 %v1353, %v1436
      %v1453 = vmul.f32 %v1357, %v1437
      %v1454 = vmul.f32 %v1359, %v1438
      %v1455 = vmul.f32 %v1361, %v1439
      %v1456 = vmul.f32 %v1363, %v1440
      %v1457 = vmul.f32 %v1367, %v1441
      %v1458 = vmul.f32 %v1369, %v1442
      %v1459 = vmul.f32 %v1371, %v1443
      %v1460 = vmul.f32 %v1373, %v1444
      %v1461 = vmul.f32 %v1377, %v1445
      %v1462 = vmul.f32 %v1379, %v1446
      %v1463 = vmul.f32 %v1381, %v1447
      %v1464 = vmul.f32 %v1383, %v1448
      %v1465 = vld [vmem:[#allocation2 + $0x6] sm:$0x3]
      %v1466 = vadd.f32 %v1449, %v1451
      %v1467 = vadd.f32 %v1466, %v1453
      %v1468 = vadd.f32 %v1467, %v1455
      %v1469 = vadd.f32 %v1468, %v1457
      %v1470 = vadd.f32 %v1469, %v1459
      %v1471 = vadd.f32 %v1470, %v1461
      %v1472 = vadd.f32 %v1471, %v1463
      %v1473 = vrot.slane %v1472, 4
      %v1474 = vadd.f32 %v1472, %v1473
      %v1475 = vrot.slane %v1474, 2
      %v1476 = vadd.f32 %v1474, %v1475
      %v1477 = vrot.slane %v1476, 1
      %v1478 = vadd.f32 %v1476, %v1477
      %v1479 = vadd.f32 %v1450, %v1452
      %v1480 = vadd.f32 %v1479, %v1454
      %v1481 = vadd.f32 %v1480, %v1456
      %v1482 = vadd.f32 %v1481, %v1458
      %v1483 = vadd.f32 %v1482, %v1460
      %v1484 = vadd.f32 %v1483, %v1462
      %v1485 = vadd.f32 %v1484, %v1464
      %v1486 = vrot.slane %v1485, 4
      %v1487 = vadd.f32 %v1485, %v1486
      %v1488 = vrot.slane %v1487, 2
      %v1489 = vadd.f32 %v1487, %v1488
      %v1490 = vrot.slane %v1489, 1
      %v1491 = vadd.f32 %v1489, %v1490
      %v1494 = vcombine.low %v1478, %v1491
      %v1496 = vunpack.c.l.s4 1966171168
      %v1497 = vunpack.c.0.s8 %v1496
      %v1498 = vlaneseq
      %v1499 = vshrl.u32 %v1498, 7
      %v1500 = vsub.s32 %v1497, %v1499
      %v1501 = vrot.slane %v1494, %v1500
      %v1503 = vunpack.c.l.s4 1966171168
      %v1504 = vunpack.c.0.s8 %v1503
      %v1505 = vlaneseq
      %v1506 = vshrl.u32 %v1505, 7
      %v1507 = vsub.s32 %v1504, %v1506
      %v1508 = vrot.slane %v1501, %v1507
      %v1510 = vadd.f32 %v1465, %v1508
      %1511 = vst.msk [vmem:[#allocation2 + $0x6] sm:$0x3] %vm802, %v1510
      %v1512 = vld [vmem:[%s335 + $0x20] sm:$0xff]
      %v1513 = vld [vmem:[%s335 + $0x48] sm:$0xff]
      %v1514 = vld [vmem:[%s335 + $0x70] sm:$0xff]
      %v1515 = vld [vmem:[%s335 + $0x98] sm:$0xff]
      %v1516 = vld [vmem:[%s339 + $0x8] sm:$0x3]
      %v1518 = vlaneseq
      %v1519 = vshrl.u32 %v1518, 7
      %v1520 = vsub.s32 0, %v1519
      %v1521 = vrot.slane %v1516, %v1520
      %v1522 = vlaneseq
      %v1523 = vshrl.u32 %v1522, 7
      %v1524 = vsub.s32 1, %v1523
      %v1525 = vrot.slane %v1516, %v1524
      %v1532 = vunpack.c.l.b16 %v1512
      %v1533 = vunpack.c.h.b16 %v1512
      %v1534 = vunpack.c.l.b16 %v1513
      %v1535 = vunpack.c.h.b16 %v1513
      %v1536 = vunpack.c.l.b16 %v1514
      %v1537 = vunpack.c.h.b16 %v1514
      %v1538 = vunpack.c.l.b16 %v1515
      %v1539 = vunpack.c.h.b16 %v1515
      %v1540 = vpack.c.b16 %v1534, %v1532
      %v1541 = vpack.c.b16 %v1535, %v1533
      %v1542 = vpack.c.b16 %v1538, %v1536
      %v1543 = vpack.c.b16 %v1539, %v1537
      %1548 = vmatprep.subr.bf16.mxu0 %v1541
      %1549 = vmatpush1.bf16.msra.mxu0 %v1540
      %1550 = vmatprep.subr.bf16.mxu0 %v1543
      %1551 = vmatpush1.bf16.msra.mxu0 %v1542
      %1552 = vmatprep.subr.bf16.mxu0 0
      %1553 = vmatpush1.bf16.msra.mxu0 0
      %1554 = vmatprep.subr.bf16.mxu0 0
      %1555 = vmatpush1.bf16.msra.mxu0 0
      %1556 = vmatprep.subr.bf16.mxu0 0
      %1557 = vmatpush1.bf16.msra.mxu0 0
      %1558 = vmatprep.subr.bf16.mxu0 0
      %1559 = vmatpush1.bf16.msra.mxu0 0
      %1560 = vmatprep.subr.bf16.mxu0 0
      %1561 = vmatpush1.bf16.msra.mxu0 0
      %1562 = vmatprep.subr.bf16.mxu0 0
      %1563 = vmatpush1.bf16.msra.mxu0 0
      %1564 = vmatprep.subr.bf16.mxu0 0
      %1565 = vmatpush1.bf16.msra.mxu0 0
      %1566 = vmatprep.subr.bf16.mxu0 0
      %1567 = vmatpush1.bf16.msra.mxu0 0
      %1568 = vmatprep.subr.bf16.mxu0 0
      %1569 = vmatpush1.bf16.msra.mxu0 0
      %1570 = vmatprep.subr.bf16.mxu0 0
      %1571 = vmatpush1.bf16.msra.mxu0 0
      %1572 = vmatprep.subr.bf16.mxu0 0
      %1573 = vmatpush1.bf16.msra.mxu0 0
      %1574 = vmatprep.subr.bf16.mxu0 0
      %1575 = vmatpush1.bf16.msra.mxu0 0
      %1576 = vmatprep.subr.bf16.mxu0 0
      %1577 = vmatpush1.bf16.msra.mxu0 0
      %1578 = vmatprep.subr.bf16.mxu0 0
      %1579 = vmatpush1.bf16.msra.mxu0 0
      %1580 = vmatprep.mubr.bf16.mxu0 0
      %1581 = vmatmul.mubr.bf16.gmra.mrb[0].mxu0 %v589
      %v1582 = vpop.f32.mrb[0].mxu0
      %v1583 = vadd.f32 %v1521, %v1582
      %v1584 = vpop.f32.mrb[0].mxu0
      %v1585 = vadd.f32 %v1525, %v1584
      %v1586 = vpop.f32.mrb[0].mxu0
      %v1587 = vadd.f32 %v1521, %v1586
      %v1588 = vpop.f32.mrb[0].mxu0
      %v1589 = vadd.f32 %v1525, %v1588
      %1590 = vmatprep.mubr.bf16.mxu0 0
      %1591 = vmatmul.mubr.bf16.gmra.mrb[0].mxu0 %v592
      %v1592 = vpop.f32.mrb[0].mxu0
      %v1593 = vadd.f32 %v1521, %v1592
      %v1594 = vpop.f32.mrb[0].mxu0
      %v1595 = vadd.f32 %v1525, %v1594
      %v1596 = vpop.f32.mrb[0].mxu0
      %v1597 = vadd.f32 %v1521, %v1596
      %v1598 = vpop.f32.mrb[0].mxu0
      %v1599 = vadd.f32 %v1525, %v1598
      %1600 = vmatprep.mubr.bf16.mxu0 0
      %1601 = vmatmul.mubr.bf16.gmra.mrb[0].mxu0 %v595
      %v1602 = vpop.f32.mrb[0].mxu0
      %v1603 = vadd.f32 %v1521, %v1602
      %v1604 = vpop.f32.mrb[0].mxu0
      %v1605 = vadd.f32 %v1525, %v1604
      %v1606 = vpop.f32.mrb[0].mxu0
      %v1607 = vadd.f32 %v1521, %v1606
      %v1608 = vpop.f32.mrb[0].mxu0
      %v1609 = vadd.f32 %v1525, %v1608
      %1610 = vmatprep.mubr.bf16.mxu0 0
      %1611 = vmatmul.mubr.bf16.gmra.mrb[0].mxu0 %v598
      %v1612 = vpop.f32.mrb[0].mxu0
      %v1613 = vadd.f32 %v1521, %v1612
      %v1614 = vpop.f32.mrb[0].mxu0
      %v1615 = vadd.f32 %v1525, %v1614
      %v1616 = vpop.f32.mrb[0].mxu0
      %v1617 = vadd.f32 %v1521, %v1616
      %v1618 = vpop.f32.mrb[0].mxu0
      %v1619 = vadd.f32 %v1525, %v1618
      %1620 = vdwg.mxu0
      %v1621 = vmul.f32 %v1583, 0.5
      %v1622 = vmul.f32 %v1585, 0.5
      %v1623 = vmul.f32 %v1587, 0.5
      %v1624 = vmul.f32 %v1589, 0.5
      %v1625 = vmul.f32 %v1593, 0.5
      %v1626 = vmul.f32 %v1595, 0.5
      %v1627 = vmul.f32 %v1597, 0.5
      %v1628 = vmul.f32 %v1599, 0.5
      %v1629 = vmul.f32 %v1603, 0.5
      %v1630 = vmul.f32 %v1605, 0.5
      %v1631 = vmul.f32 %v1607, 0.5
      %v1632 = vmul.f32 %v1609, 0.5
      %v1633 = vmul.f32 %v1613, 0.5
      %v1634 = vmul.f32 %v1615, 0.5
      %v1635 = vmul.f32 %v1617, 0.5
      %v1636 = vmul.f32 %v1619, 0.5
      %v1637 = vtanh.pop %v1621
      %v1638 = vtanh.pop %v1622
      %v1639 = vtanh.pop %v1623
      %v1640 = vtanh.pop %v1624
      %v1641 = vtanh.pop %v1625
      %v1642 = vtanh.pop %v1626
      %v1643 = vtanh.pop %v1627
      %v1644 = vtanh.pop %v1628
      %v1645 = vtanh.pop %v1629
      %v1646 = vtanh.pop %v1630
      %v1647 = vtanh.pop %v1631
      %v1648 = vtanh.pop %v1632
      %v1649 = vtanh.pop %v1633
      %v1650 = vtanh.pop %v1634
      %v1651 = vtanh.pop %v1635
      %v1652 = vtanh.pop %v1636
      %v1653 = vmul.f32 %v1637, 0.5
      %v1654 = vmul.f32 %v1638, 0.5
      %v1655 = vmul.f32 %v1639, 0.5
      %v1656 = vmul.f32 %v1640, 0.5
      %v1657 = vmul.f32 %v1641, 0.5
      %v1658 = vmul.f32 %v1642, 0.5
      %v1659 = vmul.f32 %v1643, 0.5
      %v1660 = vmul.f32 %v1644, 0.5
      %v1661 = vmul.f32 %v1645, 0.5
      %v1662 = vmul.f32 %v1646, 0.5
      %v1663 = vmul.f32 %v1647, 0.5
      %v1664 = vmul.f32 %v1648, 0.5
      %v1665 = vmul.f32 %v1649, 0.5
      %v1666 = vmul.f32 %v1650, 0.5
      %v1667 = vmul.f32 %v1651, 0.5
      %v1668 = vmul.f32 %v1652, 0.5
      %v1669 = vadd.f32 %v1653, 0.5
      %v1670 = vadd.f32 %v1654, 0.5
      %v1671 = vadd.f32 %v1655, 0.5
      %v1672 = vadd.f32 %v1656, 0.5
      %v1673 = vadd.f32 %v1657, 0.5
      %v1674 = vadd.f32 %v1658, 0.5
      %v1675 = vadd.f32 %v1659, 0.5
      %v1676 = vadd.f32 %v1660, 0.5
      %v1677 = vadd.f32 %v1661, 0.5
      %v1678 = vadd.f32 %v1662, 0.5
      %v1679 = vadd.f32 %v1663, 0.5
      %v1680 = vadd.f32 %v1664, 0.5
      %v1681 = vadd.f32 %v1665, 0.5
      %v1682 = vadd.f32 %v1666, 0.5
      %v1683 = vadd.f32 %v1667, 0.5
      %v1684 = vadd.f32 %v1668, 0.5
      %v1685 = vmul.f32 %v1583, %v1669
      %v1686 = vmul.f32 %v1585, %v1670
      %v1687 = vmul.f32 %v1587, %v1671
      %v1688 = vmul.f32 %v1589, %v1672
      %v1689 = vmul.f32 %v1593, %v1673
      %v1690 = vmul.f32 %v1595, %v1674
      %v1691 = vmul.f32 %v1597, %v1675
      %v1692 = vmul.f32 %v1599, %v1676
      %v1693 = vmul.f32 %v1603, %v1677
      %v1694 = vmul.f32 %v1605, %v1678
      %v1695 = vmul.f32 %v1607, %v1679
      %v1696 = vmul.f32 %v1609, %v1680
      %v1697 = vmul.f32 %v1613, %v1681
      %v1698 = vmul.f32 %v1615, %v1682
      %v1699 = vmul.f32 %v1617, %v1683
      %v1700 = vmul.f32 %v1619, %v1684
      %v1701 = vld [vmem:[#allocation2 + $0x8] sm:$0x3]
      %v1702 = vadd.f32 %v1685, %v1687
      %v1703 = vadd.f32 %v1702, %v1689
      %v1704 = vadd.f32 %v1703, %v1691
      %v1705 = vadd.f32 %v1704, %v1693
      %v1706 = vadd.f32 %v1705, %v1695
      %v1707 = vadd.f32 %v1706, %v1697
      %v1708 = vadd.f32 %v1707, %v1699
      %v1709 = vrot.slane %v1708, 4
      %v1710 = vadd.f32 %v1708, %v1709
      %v1711 = vrot.slane %v1710, 2
      %v1712 = vadd.f32 %v1710, %v1711
      %v1713 = vrot.slane %v1712, 1
      %v1714 = vadd.f32 %v1712, %v1713
      %v1715 = vadd.f32 %v1686, %v1688
      %v1716 = vadd.f32 %v1715, %v1690
      %v1717 = vadd.f32 %v1716, %v1692
      %v1718 = vadd.f32 %v1717, %v1694
      %v1719 = vadd.f32 %v1718, %v1696
      %v1720 = vadd.f32 %v1719, %v1698
      %v1721 = vadd.f32 %v1720, %v1700
      %v1722 = vrot.slane %v1721, 4
      %v1723 = vadd.f32 %v1721, %v1722
      %v1724 = vrot.slane %v1723, 2
      %v1725 = vadd.f32 %v1723, %v1724
      %v1726 = vrot.slane %v1725, 1
      %v1727 = vadd.f32 %v1725, %v1726
      %v1730 = vcombine.low %v1714, %v1727
      %v1732 = vunpack.c.l.s4 1966171168
      %v1733 = vunpack.c.0.s8 %v1732
      %v1734 = vlaneseq
      %v1735 = vshrl.u32 %v1734, 7
      %v1736 = vsub.s32 %v1733, %v1735
      %v1737 = vrot.slane %v1730, %v1736
      %v1739 = vunpack.c.l.s4 1966171168
      %v1740 = vunpack.c.0.s8 %v1739
      %v1741 = vlaneseq
      %v1742 = vshrl.u32 %v1741, 7
      %v1743 = vsub.s32 %v1740, %v1742
      %v1744 = vrot.slane %v1737, %v1743
      %v1746 = vadd.f32 %v1701, %v1744
      %1747 = vst.msk [vmem:[#allocation2 + $0x8] sm:$0x3] %vm802, %v1746
      // Predicated region
      $region45: #{enet_hydra_forward.1} parent=39 // pred_check
        %p1748 = pneg %p346
      $region46: #{enet_hydra_forward.1} parent=39 // pred_check_branch
        %1750 = sbr.rel (%p1748) target = $region48
      $region47: #{enet_hydra_forward.1} parent=39 // pred_region
        %v1751 = vld [vmem:[#allocation2] sm:$0xff]
        %v1752 = vld [vmem:[#allocation2 + $0x8] sm:$0x3]
        %v1753 = vmul.f32 %v1751, 0.015625
        %v1754 = vmul.f32 %v1752, 0.015625
        %s1755 = sshra.s32 %s22, 1
        %s1756 = sand.u32 %s22, 1
        %s1757 = sshra.s32 %s22, 1
        %s1758 = sand.u32 %s22, 1
        %s1759 = smul.u32 %s1755, 10
        %s1760 = smul.u32 %s1759, 2
        %s1761 = sadd.s32 %s1760, %s1758
        %s1762 = scalar_lea.vmem %s344, %s1761
        %1763 = vst [vmem:[%s1762] ss:$2 sm:$0xff] %v1753
        %s1764 = sadd.s32 %s1759, 8
        %s1765 = smul.u32 %s1764, 2
        %s1766 = sadd.s32 %s1765, %s1758
        %s1767 = scalar_lea.vmem %s344, %s1766
        %1768 = vst.msk [vmem:[%s1767] ss:$2 sm:$0x3] %vm802, %v1754
      $region48: #{enet_hydra_forward.1} parent=39 // pred_fallthru
        _
      %p1769 = scmp.lt.s32.totalorder %s21, 1
      %s1770 = scalar_select %p1769, %s21, 1
      %s1771 = smul.addr %s1770, 10
      %s1772 = smul.addr %s1771, 2
      %s1773 = scalar_lea.vmem %s5, %s1772
      // Predicated region
      $region49: #{enet_hydra_forward.1} parent=39 // pred_check
        %p1774 = pneg %p187
      $region50: #{enet_hydra_forward.1} parent=39 // pred_check_branch
        %1776 = sbr.rel (%p1774) target = $region52
      $region51: #{enet_hydra_forward.1} parent=39 // pred_region
        _
      $region52: #{enet_hydra_forward.1} parent=39 // pred_fallthru
        _
    $region40: #{enet_hydra_forward.1} parent=5 // pred_fallthru
      _
    %p1777 = scmp.le.s32.totalorder 2, %s11
    // Predicated region
    $region53: #{enet_hydra_forward.1} parent=5 // pred_check
      %p1778 = pneg %p1777
    $region54: #{enet_hydra_forward.1} parent=5 // pred_check_branch
      %1780 = sbr.rel (%p1778) target = $region56
    $region55: #{enet_hydra_forward.1} parent=5 // pred_region
      %s1781 = ssub.s32 %s11, 2
      // Predicated region
      $region57: #{enet_hydra_forward.1} parent=55 // pred_check
        %p1782 = pneg %p193
      $region58: #{enet_hydra_forward.1} parent=55 // pred_check_branch
        %1784 = sbr.rel (%p1782) target = $region60
      $region59: #{enet_hydra_forward.1} parent=55 // pred_region
        %p1785 = scmp.lt.s32.totalorder %s24, 1
        %s1786 = scalar_select %p1785, %s24, 1
        %s1787 = smul.addr %s1786, 10
        %s1788 = smul.addr %s1787, 2
        %s1789 = scalar_lea.vmem %s5, %s1788
      $region60: #{enet_hydra_forward.1} parent=55 // pred_fallthru
        _
    $region56: #{enet_hydra_forward.1} parent=5 // pred_fallthru
      _
  $region6: #{enet_hydra_forward.1} parent=0 // loop_footer
    %s15 = sadd.s32 1, %s11
  $region7: #{enet_hydra_forward.1} parent=0 // loop_footer_branch
    %10 = sbr.rel target = $region3
  $region8: #{enet_hydra_forward.1} parent=0 // loop_exit
    _

</llo_original>
